<compile_context>
chip_gen: v6e
topology: v6e:2x2x1
jax: 0.10.0
libtpu: 0.0.40
codegen_flags: <defaults>
</compile_context>

<pallas_src>
import functools

import jax
import jax.numpy as jnp
from jax.experimental import pallas as pl
from jax.experimental.pallas import tpu as pltpu

# ----------------------------- model hyper-params ---------------------------
B = 2            # batch
V = 16           # n_vertex
T = 8            # input time steps
Kt = 3           # temporal kernel size
Ks = 3           # Chebyshev order
Ko = T - 2 * (Kt - 1)          # = 4 (time left after encode)
C0 = 1           # n_feature == blocks[0][0]
C1, C2, C3 = 8, 4, 8           # blocks[1]
CD = 8           # blocks[2][0]
CE = 1           # blocks[3][0]  (end channel)
LN_EPS = 1e-5

SLAB_LANES = 256     # lane width of the packed weight slab (max piece width)
ROW_ALIGN = 16       # bf16 sublane packing -> align every piece to 16 rows
OUT_LANES = 128      # fc2 / output padded to a full lane tile


# ------------------- host-side (one time) weight folding + packing ----------
def _pack_slab(pieces):
    """Stack 2-D pieces along the sublane axis into one bf16 [R, 256] slab.

    Returns (slab, layout) with layout[name] = (row_offset, n_rows, n_cols)
    as plain Python ints (baked into the kernel as static slices)."""
    layout = {}
    chunks = []
    r = 0
    for name, arr in pieces:
        a = jnp.asarray(arr, jnp.float32)
        nr, nc = a.shape
        a = jnp.pad(a, ((0, (-nr) % ROW_ALIGN), (0, SLAB_LANES - nc)))
        layout[name] = (r, nr, nc)
        chunks.append(a)
        r += a.shape[0]
    slab = jnp.concatenate(chunks, axis=0).astype(jnp.bfloat16)
    return slab, layout


def prepare_fused_params(params, cheb):
    """Fold residuals / cheb / per-vertex 1x1 maps into V-block-diagonal
    weights acting on the [*, V*C] lane layout, fuse the GLU P/Q halves, and
    pack everything into one lane-dense bf16 slab.  Runs once, off hot path."""
    eye_v = jnp.eye(V, dtype=jnp.float32)

    def temporal(w, b, aw, ab, kt, c_in, c_out):
        wp = w[:, :c_out]
        wq = w[:, c_out:]
        # fold the 1x1 residual conv into tap (kt-1) of the P half
        wp = wp.at[(kt - 1) * c_in:, :].add(aw)
        big = lambda wr: jnp.einsum(
            'vw,kio->kviwo', eye_v, wr.reshape(kt, c_in, c_out)
        ).reshape(kt * V * c_in, V * c_out)
        # fuse P||Q along N -> a single matmul per temporal tap
        w_fused = jnp.concatenate([big(wp), big(wq)], axis=1)
        b_fused = jnp.concatenate(
            [jnp.tile(b[:c_out] + ab, V), jnp.tile(b[c_out:], V)]
        ).reshape(1, 2 * V * c_out)
        return w_fused, b_fused

    t1_w, t1_b = temporal(params["t1_w"], params["t1_b"],
                          params["t1_aw"], params["t1_ab"], Kt, C0, C1)
    t2_w, t2_b = temporal(params["t2_w"], params["t2_b"],
                          params["t2_aw"], params["t2_ab"], Kt, C2, C3)
    dt_w, dt_b = temporal(params["dt_w"], params["dt_b"],
                          params["dt_aw"], params["dt_ab"], Ko, C3, CD)

    # Chebyshev graph conv:  sum_k cheb_k (x) theta_k  + I (x) wa   (+ bias)
    theta_r = params["gc_theta"].reshape(Ks, C1, C2)
    gc_w = (jnp.einsum('kuv,kio->uivo', cheb, theta_r)
            + jnp.einsum('uv,io->uivo', eye_v, params["gc_aw"])
            ).reshape(V * C1, V * C2)
    gc_b = jnp.tile(params["gc_b"] + params["gc_ab"], V).reshape(1, V * C2)

    # FC head (per-vertex 1x1 convs -> V-block-diagonal); fc2 padded to 128
    fc1_w = jnp.einsum('vw,io->viwo', eye_v, params["fc1_w"]).reshape(
        V * CD, V * CD)
    fc1_b = jnp.tile(params["fc1_b"], V).reshape(1, V * CD)
    fc2_w = jnp.einsum('vw,io->viwo', eye_v, params["fc2_w"]).reshape(
        V * CD, V * CE)
    fc2_w = jnp.pad(fc2_w, ((0, 0), (0, OUT_LANES - V * CE)))
    fc2_b = jnp.pad(jnp.tile(params["fc2_b"], V),
                    (0, OUT_LANES - V * CE)).reshape(1, OUT_LANES)

    pieces = [
        ("t1_w", t1_w), ("t1_b", t1_b),
        ("gc_w", gc_w), ("gc_b", gc_b),
        ("t2_w", t2_w), ("t2_b", t2_b),
        ("ln1_g", params["ln1_g"].reshape(1, V * C3)),
        ("ln1_b", params["ln1_b"].reshape(1, V * C3)),
        ("dt_w", dt_w), ("dt_b", dt_b),
        ("ln2_g", params["ln2_g"].reshape(1, V * CD)),
        ("ln2_b", params["ln2_b"].reshape(1, V * CD)),
        ("fc1_w", fc1_w), ("fc1_b", fc1_b),
        ("fc2_w", fc2_w), ("fc2_b", fc2_b),
    ]
    return _pack_slab(pieces)


# ----------------------------- fused Pallas kernel --------------------------
def _make_kernel(layout, bb):
    """Build the fused kernel for a static batch-block size `bb` and a static
    weight-slab layout (dict of python ints -> static slices, zero cost)."""
    f32 = jnp.float32
    bf16 = jnp.bfloat16

    def kernel(x_ref, slab_ref, o_ref):
        def wslice(name, r_off=0, n_rows=None):
            r0, nr, nc = layout[name]
            if n_rows is None:
                n_rows = nr
            start = r0 + r_off
            return slab_ref[start:start + n_rows, 0:nc]      # bf16 view load

        def tconv(h3, kt, wname, bname, c_in, c_out):
            # Gated (GLU) temporal conv; P||Q fused into one matmul per tap;
            # the 1x1 residual conv / biases are pre-folded on the host.
            t_in = h3.shape[1]
            t_out = t_in - kt + 1
            vci = V * c_in
            half = V * c_out
            h3b = h3.astype(bf16)
            acc = None
            for k in range(kt):                               # static unroll
                hk = h3b[:, k:k + t_out, :].reshape(bb * t_out, vci)
                wk = wslice(wname, r_off=k * vci, n_rows=vci)  # [vci, 2*half]
                d = jnp.dot(hk, wk, preferred_element_type=f32)
                acc = d if acc is None else acc + d
            pq = acc + wslice(bname).astype(f32)              # [rows, 2*half]
            out = pq[:, :half] * jax.nn.sigmoid(pq[:, half:])  # GLU (f32)
            return out.reshape(bb, t_out, half)

        def lnorm(h2, gname, bname):                          # h2: [rows, n] f32
            mu = jnp.mean(h2, axis=-1, keepdims=True)
            var = jnp.mean((h2 - mu) ** 2, axis=-1, keepdims=True)
            g = wslice(gname).astype(f32)
            b = wslice(bname).astype(f32)
            return (h2 - mu) * jax.lax.rsqrt(var + LN_EPS) * g + b

        h = x_ref[...]                                        # [bb, T, V*C0] f32

        # -------- Encode: TGC -> Cheb graph conv (+res, ReLU) -> TGC -> LN --
        h = tconv(h, Kt, "t1_w", "t1_b", C0, C1)              # [bb, T-2, V*C1]
        rows1 = bb * (T - 2)
        g2 = jnp.dot(h.reshape(rows1, V * C1).astype(bf16), wslice("gc_w"),
                     preferred_element_type=f32)
        g2 = jnp.maximum(g2 + wslice("gc_b").astype(f32), 0.0)
        h = g2.reshape(bb, T - 2, V * C2)
        h = tconv(h, Kt, "t2_w", "t2_b", C2, C3)              # [bb, Ko, V*C3]
        rows2 = bb * Ko
        h = lnorm(h.reshape(rows2, V * C3), "ln1_g", "ln1_b").reshape(
            bb, Ko, V * C3)
        # dropout(drop_rate) is identity at inference.

        # -------- Decode: TGC(Ko) -> LN -> FC+sigmoid -> FC ------------------
        h = tconv(h, Ko, "dt_w", "dt_b", C3, CD)              # [bb, 1, V*CD]
        h2 = lnorm(h.reshape(bb, V * CD), "ln2_g", "ln2_b")   # [bb, V*CD]
        h2 = jax.nn.sigmoid(
            jnp.dot(h2.astype(bf16), wslice("fc1_w"), preferred_element_type=f32)
            + wslice("fc1_b").astype(f32))
        h2 = (jnp.dot(h2.astype(bf16), wslice("fc2_w"), preferred_element_type=f32)
              + wslice("fc2_b").astype(f32))                  # [bb, 128] lane-dense
        o_ref[0] = h2

    return kernel


# ----------------------------- forward wrapper ------------------------------
def _batch_block(b):
    """Batch elements per grid step.  v7x (2 TensorCores/chip): keep >=2
    grid steps so both cores get work; v5e/v6e (1 TC): one step, whole batch
    stacked into the matmul M dimension."""
    kind = ""
    try:
        kind = jax.devices()[0].device_kind.lower()
    except Exception:
        pass
    if ("v7" in kind or "7x" in kind) and b >= 2 and b % 2 == 0:
        return b // 2
    return b


def build_forward(layout):
    """Returns a jitted fwd(slab, x) with the slab layout baked in (static)."""

    def fwd(slab, x):
        b, c0, t, v = x.shape
        # one cheap layout transform at the boundary: NCHW -> [B, T, V*C0]
        x3 = jnp.transpose(x, (0, 2, 3, 1)).reshape(b, t, v * c0)

        bb = _batch_block(b)
        if b % bb:
            bb = b
        n_blk = b // bb
        kernel = _make_kernel(layout, bb)

        out = pl.pallas_call(
            kernel,
            out_shape=jax.ShapeDtypeStruct((n_blk, bb, OUT_LANES), jnp.float32),
            grid_spec=pltpu.PrefetchScalarGridSpec(
                num_scalar_prefetch=0,
                grid=(n_blk,),
                in_specs=[
                    pl.BlockSpec((bb, t, v * c0), lambda i: (i, 0, 0)),
                    pl.BlockSpec(slab.shape, lambda i: (0, 0)),   # VMEM-resident
                ],
                out_specs=pl.BlockSpec((1, bb, OUT_LANES), lambda i: (i, 0, 0)),
            ),
            compiler_params=pltpu.CompilerParams(
                dimension_semantics=("parallel",)),
        )(x3, slab)

        # [n_blk, bb, 128] -> [B, V*CE] (col = v*CE + ce) -> NCHW [B, CE, 1, V]
        out2 = out.reshape(b, OUT_LANES)[:, :V * CE]
        return jnp.transpose(out2.reshape(b, 1, v, CE), (0, 3, 1, 2))

    return jax.jit(fwd)


# ----------------------- plain-JAX reference (for checking) -----------------
_dot = functools.partial(jnp.dot, precision=jax.lax.Precision.HIGHEST)


def reference_forward(params, x, cheb):
    def tgc(x, w, b, aw, ab, kt):
        bb, c_in, t, v = x.shape
        c_out = w.shape[1] // 2
        t_out = t - kt + 1
        cols = [x[:, :, k:k + t_out, :] for k in range(kt)]
        xc = jnp.stack(cols, axis=1)
        xc = jnp.transpose(xc, (0, 3, 4, 1, 2)).reshape(bb * t_out * v, kt * c_in)
        pq = _dot(xc, w)
        p, q = pq[:, :c_out], pq[:, c_out:]
        xr = jnp.transpose(x[:, :, kt - 1:, :], (0, 2, 3, 1)).reshape(
            bb * t_out * v, c_in)
        res = _dot(xr, aw)
        out = (p + (b[:c_out] + ab) + res) * jax.nn.sigmoid(q + b[c_out:])
        return jnp.transpose(out.reshape(bb, t_out, v, c_out), (0, 3, 1, 2))

    def gcn(x, theta, b, cheb, aw, ab):
        bb, c_in, t, v = x.shape
        ks = cheb.shape[0]
        c_out = theta.shape[1]
        x2d = x.reshape(bb * c_in * t, v)
        xk = jnp.stack([_dot(x2d, cheb[k]) for k in range(ks)], 0).reshape(
            ks, bb, c_in, t, v)
        xk = jnp.transpose(xk, (1, 3, 4, 0, 2)).reshape(bb * t * v, ks * c_in)
        y = _dot(xk, theta)
        xr = jnp.transpose(x, (0, 2, 3, 1)).reshape(bb * t * v, c_in)
        res = _dot(xr, aw)
        out = jnp.maximum(y + (b + ab) + res, 0.0)
        return jnp.transpose(out.reshape(bb, t, v, c_out), (0, 3, 1, 2))

    def ln(x, g, bt):
        bb, c, t, v = x.shape
        xp = jnp.transpose(x, (0, 2, 3, 1)).reshape(bb * t, v * c)
        mu = xp.mean(-1, keepdims=True)
        var = ((xp - mu) ** 2).mean(-1, keepdims=True)
        y = (xp - mu) * jax.lax.rsqrt(var + LN_EPS) * g.reshape(1, -1) + \
            bt.reshape(1, -1)
        return jnp.transpose(y.reshape(bb, t, v, c), (0, 3, 1, 2))

    def fc(x, w, bias, act):
        bb, c_in, t, v = x.shape
        c_out = w.shape[1]
        x2d = jnp.transpose(x, (0, 2, 3, 1)).reshape(bb * t * v, c_in)
        y = _dot(x2d, w) + bias
        if act == "sigmoid":
            y = jax.nn.sigmoid(y)
        return jnp.transpose(y.reshape(bb, t, v, c_out), (0, 3, 1, 2))

    h = tgc(x, params["t1_w"], params["t1_b"], params["t1_aw"], params["t1_ab"], Kt)
    h = gcn(h, params["gc_theta"], params["gc_b"], cheb,
            params["gc_aw"], params["gc_ab"])
    h = tgc(h, params["t2_w"], params["t2_b"], params["t2_aw"], params["t2_ab"], Kt)
    h = ln(h, params["ln1_g"], params["ln1_b"])
    h = tgc(h, params["dt_w"], params["dt_b"], params["dt_aw"], params["dt_ab"], Ko)
    h = ln(h, params["ln2_g"], params["ln2_b"])
    h = fc(h, params["fc1_w"], params["fc1_b"], "sigmoid")
    h = fc(h, params["fc2_w"], params["fc2_b"], "none")
    return h


# ----------------------------- parameter / graph init -----------------------
def init_params(key):
    ks = jax.random.split(key, 20)
    w = lambda k, s: 0.1 * jax.random.normal(k, s, jnp.float32)
    return {
        # encode: temporal gated conv 1 (C0 -> C1)
        "t1_w": w(ks[0], (Kt * C0, 2 * C1)), "t1_b": w(ks[1], (2 * C1,)),
        "t1_aw": w(ks[2], (C0, C1)), "t1_ab": w(ks[3], (C1,)),
        # encode: Chebyshev graph conv (C1 -> C2)
        "gc_theta": w(ks[4], (Ks * C1, C2)), "gc_b": w(ks[5], (C2,)),
        "gc_aw": w(ks[6], (C1, C2)), "gc_ab": w(ks[7], (C2,)),
        # encode: temporal gated conv 2 (C2 -> C3)
        "t2_w": w(ks[8], (Kt * C2, 2 * C3)), "t2_b": w(ks[9], (2 * C3,)),
        "t2_aw": w(ks[10], (C2, C3)), "t2_ab": w(ks[11], (C3,)),
        "ln1_g": jnp.ones((V, C3), jnp.float32),
        "ln1_b": jnp.zeros((V, C3), jnp.float32),
        # decode: temporal gated conv with kernel Ko (C3 -> CD)
        "dt_w": w(ks[12], (Ko * C3, 2 * CD)), "dt_b": w(ks[13], (2 * CD,)),
        "dt_aw": w(ks[14], (C3, CD)), "dt_ab": w(ks[15], (CD,)),
        "ln2_g": jnp.ones((V, CD), jnp.float32),
        "ln2_b": jnp.zeros((V, CD), jnp.float32),
        # decode: FC layers
        "fc1_w": w(ks[16], (CD, CD)), "fc1_b": w(ks[17], (CD,)),
        "fc2_w": w(ks[18], (CD, CE)), "fc2_b": w(ks[19], (CE,)),
    }


def make_cheb_polys(n):
    """Chebyshev polynomials T_0..T_{Ks-1} of the scaled Laplacian of a ring."""
    adj = jnp.zeros((n, n), jnp.float32)
    idx = jnp.arange(n)
    adj = adj.at[idx, (idx + 1) % n].set(1.0)
    adj = adj.at[idx, (idx - 1) % n].set(1.0)
    deg = jnp.sum(adj, axis=1)
    d_inv_sqrt = 1.0 / jnp.sqrt(deg)
    lap = jnp.eye(n) - (d_inv_sqrt[:, None] * adj * d_inv_sqrt[None, :])
    l_tilde = lap - jnp.eye(n)          # 2*L/lambda_max - I  with lambda_max=2
    polys = [jnp.eye(n, dtype=jnp.float32), l_tilde]
    for _ in range(2, Ks):
        polys.append(2.0 * l_tilde @ polys[-1] - polys[-2])
    return jnp.stack(polys[:Ks], axis=0)                       # [Ks, V, V]


# ----------------------------- main ------------------------------------------
if __name__ == "__main__":
    key = jax.random.PRNGKey(0)
    k_param, k_x = jax.random.split(key)
    params = init_params(k_param)
    cheb = make_cheb_polys(V)
    x = jax.random.normal(k_x, (B, C0, T, V), jnp.float32)      # NCHW input

    slab, layout = prepare_fused_params(params, cheb)           # host-side, once
    fwd = build_forward(layout)
    out = jax.block_until_ready(fwd(slab, x))

    assert out.shape == (B, CE, 1, V), out.shape
    assert bool(jnp.all(jnp.isfinite(out)))

    # correctness check against a plain-JAX f32 reference of the same forward
    ref = jax.block_until_ready(jax.jit(reference_forward)(params, x, cheb))
    err = float(jnp.max(jnp.abs(out - ref)))
    # tolerance accounts for bf16 weights / matmul operands (f32 accumulation)
    assert err < 2e-2, f"kernel/reference mismatch: max abs err = {err}"

    print("KERNEL_OK")
</pallas_src>

<mosaic_0001>
module attributes {stable_mosaic.version = 11 : i64} {
  func.func @kernel(%arg0: i32, %arg1: memref<2x8x16xf32, #tpu.memory_space<vmem>>, %arg2: memref<1296x256xbf16, #tpu.memory_space<vmem>>, %arg3: memref<1x2x128xf32, #tpu.memory_space<vmem>>) attributes {dimension_semantics = [#tpu.dimension_semantics<parallel>], iteration_bounds = array<i64: 1>, scalar_prefetch = 0 : i64, scratch_operands = 0 : i64, tpu.core_type = #tpu.core_type<tc>, window_params = [{transform_indices = @transform_0, window_bounds = array<i64: 2, 8, 16>}, {pipeline_mode = #tpu.pipeline_mode<synchronous>, transform_indices = @transform_1, window_bounds = array<i64: 1296, 256>}, {transform_indices = @transform_2, window_bounds = array<i64: 1, 2, 128>}]} {
    %c0 = arith.constant 0 : index
    %c0_0 = arith.constant 0 : index
    %c0_1 = arith.constant 0 : index
    %0 = vector.load %arg1[%c0, %c0_0, %c0_1] : memref<2x8x16xf32, #tpu.memory_space<vmem>>, vector<2x8x16xf32>
    %1 = arith.truncf %0 : vector<2x8x16xf32> to vector<2x8x16xbf16>
    %2 = vector.extract_strided_slice %1 {offsets = [0, 0, 0], sizes = [2, 6, 16], strides = [1, 1, 1]} : vector<2x8x16xbf16> to vector<2x6x16xbf16>
    %3 = vector.shape_cast %2 : vector<2x6x16xbf16> to vector<12x16xbf16>
    %c0_2 = arith.constant 0 : index
    %c0_3 = arith.constant 0 : index
    %4 = vector.load %arg2[%c0_2, %c0_3] : memref<1296x256xbf16, #tpu.memory_space<vmem>>, vector<16x256xbf16>
    %cst = arith.constant dense<0.000000e+00> : vector<12x256xf32>
    %5 = tpu.matmul %3, %4, %cst {dimension_numbers = #tpu.dot_dimension_numbers<[1], [0], [0], [1], [0, 0, 1, 1], [], []>} : vector<12x16xbf16>, vector<16x256xbf16>, vector<12x256xf32> -> vector<12x256xf32>
    %6 = vector.extract_strided_slice %1 {offsets = [0, 1, 0], sizes = [2, 6, 16], strides = [1, 1, 1]} : vector<2x8x16xbf16> to vector<2x6x16xbf16>
    %7 = vector.shape_cast %6 : vector<2x6x16xbf16> to vector<12x16xbf16>
    %c16 = arith.constant 16 : index
    %c0_4 = arith.constant 0 : index
    %8 = vector.load %arg2[%c16, %c0_4] : memref<1296x256xbf16, #tpu.memory_space<vmem>>, vector<16x256xbf16>
    %cst_5 = arith.constant dense<0.000000e+00> : vector<12x256xf32>
    %9 = tpu.matmul %7, %8, %cst_5 {dimension_numbers = #tpu.dot_dimension_numbers<[1], [0], [0], [1], [0, 0, 1, 1], [], []>} : vector<12x16xbf16>, vector<16x256xbf16>, vector<12x256xf32> -> vector<12x256xf32>
    %10 = arith.addf %5, %9 : vector<12x256xf32>
    %11 = vector.extract_strided_slice %1 {offsets = [0, 2, 0], sizes = [2, 6, 16], strides = [1, 1, 1]} : vector<2x8x16xbf16> to vector<2x6x16xbf16>
    %12 = vector.shape_cast %11 : vector<2x6x16xbf16> to vector<12x16xbf16>
    %c32 = arith.constant 32 : index
    %c0_6 = arith.constant 0 : index
    %13 = vector.load %arg2[%c32, %c0_6] : memref<1296x256xbf16, #tpu.memory_space<vmem>>, vector<16x256xbf16>
    %cst_7 = arith.constant dense<0.000000e+00> : vector<12x256xf32>
    %14 = tpu.matmul %12, %13, %cst_7 {dimension_numbers = #tpu.dot_dimension_numbers<[1], [0], [0], [1], [0, 0, 1, 1], [], []>} : vector<12x16xbf16>, vector<16x256xbf16>, vector<12x256xf32> -> vector<12x256xf32>
    %15 = arith.addf %10, %14 : vector<12x256xf32>
    %c48 = arith.constant 48 : index
    %c0_8 = arith.constant 0 : index
    %16 = vector.load %arg2[%c48, %c0_8] : memref<1296x256xbf16, #tpu.memory_space<vmem>>, vector<1x256xbf16>
    %17 = arith.extf %16 : vector<1x256xbf16> to vector<1x256xf32>
    %18 = vector.broadcast %17 : vector<1x256xf32> to vector<12x256xf32>
    %19 = arith.addf %15, %18 : vector<12x256xf32>
    %20 = vector.extract_strided_slice %19 {offsets = [0, 0], sizes = [12, 128], strides = [1, 1]} : vector<12x256xf32> to vector<12x128xf32>
    %21 = vector.extract_strided_slice %19 {offsets = [0, 128], sizes = [12, 128], strides = [1, 1]} : vector<12x256xf32> to vector<12x128xf32>
    %22 = arith.negf %21 : vector<12x128xf32>
    %23 = math.exp %22 : vector<12x128xf32>
    %cst_9 = arith.constant 1.000000e+00 : f32
    %24 = vector.broadcast %cst_9 : f32 to vector<12x128xf32>
    %25 = arith.addf %24, %23 : vector<12x128xf32>
    %26 = arith.divf %24, %25 : vector<12x128xf32>
    %27 = arith.mulf %20, %26 : vector<12x128xf32>
    %28 = vector.shape_cast %27 : vector<12x128xf32> to vector<2x6x128xf32>
    %29 = vector.shape_cast %28 : vector<2x6x128xf32> to vector<12x128xf32>
    %30 = arith.truncf %29 : vector<12x128xf32> to vector<12x128xbf16>
    %c64 = arith.constant 64 : index
    %c0_10 = arith.constant 0 : index
    %31 = vector.load %arg2[%c64, %c0_10] : memref<1296x256xbf16, #tpu.memory_space<vmem>>, vector<128x64xbf16>
    %cst_11 = arith.constant dense<0.000000e+00> : vector<12x64xf32>
    %32 = tpu.matmul %30, %31, %cst_11 {dimension_numbers = #tpu.dot_dimension_numbers<[1], [0], [0], [1], [0, 0, 1, 1], [], []>} : vector<12x128xbf16>, vector<128x64xbf16>, vector<12x64xf32> -> vector<12x64xf32>
    %c192 = arith.constant 192 : index
    %c0_12 = arith.constant 0 : index
    %33 = vector.load %arg2[%c192, %c0_12] : memref<1296x256xbf16, #tpu.memory_space<vmem>>, vector<1x64xbf16>
    %34 = arith.extf %33 : vector<1x64xbf16> to vector<1x64xf32>
    %35 = vector.broadcast %34 : vector<1x64xf32> to vector<12x64xf32>
    %36 = arith.addf %32, %35 : vector<12x64xf32>
    %cst_13 = arith.constant 0.000000e+00 : f32
    %37 = vector.broadcast %cst_13 : f32 to vector<12x64xf32>
    %38 = arith.maximumf %36, %37 : vector<12x64xf32>
    %39 = vector.shape_cast %38 : vector<12x64xf32> to vector<2x6x64xf32>
    %40 = arith.truncf %39 : vector<2x6x64xf32> to vector<2x6x64xbf16>
    %41 = vector.extract_strided_slice %40 {offsets = [0, 0, 0], sizes = [2, 4, 64], strides = [1, 1, 1]} : vector<2x6x64xbf16> to vector<2x4x64xbf16>
    %42 = vector.shape_cast %41 : vector<2x4x64xbf16> to vector<8x64xbf16>
    %c208 = arith.constant 208 : index
    %c0_14 = arith.constant 0 : index
    %43 = vector.load %arg2[%c208, %c0_14] : memref<1296x256xbf16, #tpu.memory_space<vmem>>, vector<64x256xbf16>
    %cst_15 = arith.constant dense<0.000000e+00> : vector<8x256xf32>
    %44 = tpu.matmul %42, %43, %cst_15 {dimension_numbers = #tpu.dot_dimension_numbers<[1], [0], [0], [1], [0, 0, 1, 1], [], []>} : vector<8x64xbf16>, vector<64x256xbf16>, vector<8x256xf32> -> vector<8x256xf32>
    %45 = vector.extract_strided_slice %40 {offsets = [0, 1, 0], sizes = [2, 4, 64], strides = [1, 1, 1]} : vector<2x6x64xbf16> to vector<2x4x64xbf16>
    %46 = vector.shape_cast %45 : vector<2x4x64xbf16> to vector<8x64xbf16>
    %c272 = arith.constant 272 : index
    %c0_16 = arith.constant 0 : index
    %47 = vector.load %arg2[%c272, %c0_16] : memref<1296x256xbf16, #tpu.memory_space<vmem>>, vector<64x256xbf16>
    %cst_17 = arith.constant dense<0.000000e+00> : vector<8x256xf32>
    %48 = tpu.matmul %46, %47, %cst_17 {dimension_numbers = #tpu.dot_dimension_numbers<[1], [0], [0], [1], [0, 0, 1, 1], [], []>} : vector<8x64xbf16>, vector<64x256xbf16>, vector<8x256xf32> -> vector<8x256xf32>
    %49 = arith.addf %44, %48 : vector<8x256xf32>
    %50 = vector.extract_strided_slice %40 {offsets = [0, 2, 0], sizes = [2, 4, 64], strides = [1, 1, 1]} : vector<2x6x64xbf16> to vector<2x4x64xbf16>
    %51 = vector.shape_cast %50 : vector<2x4x64xbf16> to vector<8x64xbf16>
    %c336 = arith.constant 336 : index
    %c0_18 = arith.constant 0 : index
    %52 = vector.load %arg2[%c336, %c0_18] : memref<1296x256xbf16, #tpu.memory_space<vmem>>, vector<64x256xbf16>
    %cst_19 = arith.constant dense<0.000000e+00> : vector<8x256xf32>
    %53 = tpu.matmul %51, %52, %cst_19 {dimension_numbers = #tpu.dot_dimension_numbers<[1], [0], [0], [1], [0, 0, 1, 1], [], []>} : vector<8x64xbf16>, vector<64x256xbf16>, vector<8x256xf32> -> vector<8x256xf32>
    %54 = arith.addf %49, %53 : vector<8x256xf32>
    %c400 = arith.constant 400 : index
    %c0_20 = arith.constant 0 : index
    %55 = vector.load %arg2[%c400, %c0_20] : memref<1296x256xbf16, #tpu.memory_space<vmem>>, vector<1x256xbf16>
    %56 = arith.extf %55 : vector<1x256xbf16> to vector<1x256xf32>
    %57 = vector.broadcast %56 : vector<1x256xf32> to vector<8x256xf32>
    %58 = arith.addf %54, %57 : vector<8x256xf32>
    %59 = vector.extract_strided_slice %58 {offsets = [0, 0], sizes = [8, 128], strides = [1, 1]} : vector<8x256xf32> to vector<8x128xf32>
    %60 = vector.extract_strided_slice %58 {offsets = [0, 128], sizes = [8, 128], strides = [1, 1]} : vector<8x256xf32> to vector<8x128xf32>
    %61 = arith.negf %60 : vector<8x128xf32>
    %62 = math.exp %61 : vector<8x128xf32>
    %cst_21 = arith.constant 1.000000e+00 : f32
    %63 = vector.broadcast %cst_21 : f32 to vector<8x128xf32>
    %64 = arith.addf %63, %62 : vector<8x128xf32>
    %65 = arith.divf %63, %64 : vector<8x128xf32>
    %66 = arith.mulf %59, %65 : vector<8x128xf32>
    %67 = vector.shape_cast %66 : vector<8x128xf32> to vector<2x4x128xf32>
    %68 = vector.shape_cast %67 : vector<2x4x128xf32> to vector<8x128xf32>
    %cst_22 = arith.constant dense<0.000000e+00> : vector<8xf32>
    %69 = vector.multi_reduction <add>, %68, %cst_22 [1] : vector<8x128xf32> to vector<8xf32>
    %70 = vector.shape_cast %69 : vector<8xf32> to vector<8x1xf32>
    %cst_23 = arith.constant 1.280000e+02 : f32
    %71 = vector.broadcast %cst_23 : f32 to vector<8x1xf32>
    %72 = arith.divf %70, %71 : vector<8x1xf32>
    %73 = vector.broadcast %72 : vector<8x1xf32> to vector<8x128xf32>
    %74 = arith.subf %68, %73 : vector<8x128xf32>
    %75 = arith.mulf %74, %74 : vector<8x128xf32>
    %cst_24 = arith.constant dense<0.000000e+00> : vector<8xf32>
    %76 = vector.multi_reduction <add>, %75, %cst_24 [1] : vector<8x128xf32> to vector<8xf32>
    %77 = vector.shape_cast %76 : vector<8xf32> to vector<8x1xf32>
    %cst_25 = arith.constant 1.280000e+02 : f32
    %78 = vector.broadcast %cst_25 : f32 to vector<8x1xf32>
    %79 = arith.divf %77, %78 : vector<8x1xf32>
    %c416 = arith.constant 416 : index
    %c0_26 = arith.constant 0 : index
    %80 = vector.load %arg2[%c416, %c0_26] : memref<1296x256xbf16, #tpu.memory_space<vmem>>, vector<1x128xbf16>
    %81 = arith.extf %80 : vector<1x128xbf16> to vector<1x128xf32>
    %c432 = arith.constant 432 : index
    %c0_27 = arith.constant 0 : index
    %82 = vector.load %arg2[%c432, %c0_27] : memref<1296x256xbf16, #tpu.memory_space<vmem>>, vector<1x128xbf16>
    %83 = arith.extf %82 : vector<1x128xbf16> to vector<1x128xf32>
    %84 = vector.broadcast %72 : vector<8x1xf32> to vector<8x128xf32>
    %85 = arith.subf %68, %84 : vector<8x128xf32>
    %cst_28 = arith.constant 9.99999974E-6 : f32
    %86 = vector.broadcast %cst_28 : f32 to vector<8x1xf32>
    %87 = arith.addf %79, %86 : vector<8x1xf32>
    %88 = math.rsqrt %87 : vector<8x1xf32>
    %89 = vector.broadcast %88 : vector<8x1xf32> to vector<8x128xf32>
    %90 = arith.mulf %85, %89 : vector<8x128xf32>
    %91 = vector.broadcast %81 : vector<1x128xf32> to vector<8x128xf32>
    %92 = arith.mulf %90, %91 : vector<8x128xf32>
    %93 = vector.broadcast %83 : vector<1x128xf32> to vector<8x128xf32>
    %94 = arith.addf %92, %93 : vector<8x128xf32>
    %95 = vector.shape_cast %94 : vector<8x128xf32> to vector<2x4x128xf32>
    %96 = arith.truncf %95 : vector<2x4x128xf32> to vector<2x4x128xbf16>
    %97 = vector.extract_strided_slice %96 {offsets = [0, 0, 0], sizes = [2, 1, 128], strides = [1, 1, 1]} : vector<2x4x128xbf16> to vector<2x1x128xbf16>
    %98 = vector.shape_cast %97 : vector<2x1x128xbf16> to vector<2x128xbf16>
    %c448 = arith.constant 448 : index
    %c0_29 = arith.constant 0 : index
    %99 = vector.load %arg2[%c448, %c0_29] : memref<1296x256xbf16, #tpu.memory_space<vmem>>, vector<128x256xbf16>
    %cst_30 = arith.constant dense<0.000000e+00> : vector<2x256xf32>
    %100 = tpu.matmul %98, %99, %cst_30 {dimension_numbers = #tpu.dot_dimension_numbers<[1], [0], [0], [1], [0, 0, 1, 1], [], []>} : vector<2x128xbf16>, vector<128x256xbf16>, vector<2x256xf32> -> vector<2x256xf32>
    %101 = vector.extract_strided_slice %96 {offsets = [0, 1, 0], sizes = [2, 1, 128], strides = [1, 1, 1]} : vector<2x4x128xbf16> to vector<2x1x128xbf16>
    %102 = vector.shape_cast %101 : vector<2x1x128xbf16> to vector<2x128xbf16>
    %c576 = arith.constant 576 : index
    %c0_31 = arith.constant 0 : index
    %103 = vector.load %arg2[%c576, %c0_31] : memref<1296x256xbf16, #tpu.memory_space<vmem>>, vector<128x256xbf16>
    %cst_32 = arith.constant dense<0.000000e+00> : vector<2x256xf32>
    %104 = tpu.matmul %102, %103, %cst_32 {dimension_numbers = #tpu.dot_dimension_numbers<[1], [0], [0], [1], [0, 0, 1, 1], [], []>} : vector<2x128xbf16>, vector<128x256xbf16>, vector<2x256xf32> -> vector<2x256xf32>
    %105 = arith.addf %100, %104 : vector<2x256xf32>
    %106 = vector.extract_strided_slice %96 {offsets = [0, 2, 0], sizes = [2, 1, 128], strides = [1, 1, 1]} : vector<2x4x128xbf16> to vector<2x1x128xbf16>
    %107 = vector.shape_cast %106 : vector<2x1x128xbf16> to vector<2x128xbf16>
    %c704 = arith.constant 704 : index
    %c0_33 = arith.constant 0 : index
    %108 = vector.load %arg2[%c704, %c0_33] : memref<1296x256xbf16, #tpu.memory_space<vmem>>, vector<128x256xbf16>
    %cst_34 = arith.constant dense<0.000000e+00> : vector<2x256xf32>
    %109 = tpu.matmul %107, %108, %cst_34 {dimension_numbers = #tpu.dot_dimension_numbers<[1], [0], [0], [1], [0, 0, 1, 1], [], []>} : vector<2x128xbf16>, vector<128x256xbf16>, vector<2x256xf32> -> vector<2x256xf32>
    %110 = arith.addf %105, %109 : vector<2x256xf32>
    %111 = vector.extract_strided_slice %96 {offsets = [0, 3, 0], sizes = [2, 1, 128], strides = [1, 1, 1]} : vector<2x4x128xbf16> to vector<2x1x128xbf16>
    %112 = vector.shape_cast %111 : vector<2x1x128xbf16> to vector<2x128xbf16>
    %c832 = arith.constant 832 : index
    %c0_35 = arith.constant 0 : index
    %113 = vector.load %arg2[%c832, %c0_35] : memref<1296x256xbf16, #tpu.memory_space<vmem>>, vector<128x256xbf16>
    %cst_36 = arith.constant dense<0.000000e+00> : vector<2x256xf32>
    %114 = tpu.matmul %112, %113, %cst_36 {dimension_numbers = #tpu.dot_dimension_numbers<[1], [0], [0], [1], [0, 0, 1, 1], [], []>} : vector<2x128xbf16>, vector<128x256xbf16>, vector<2x256xf32> -> vector<2x256xf32>
    %115 = arith.addf %110, %114 : vector<2x256xf32>
    %c960 = arith.constant 960 : index
    %c0_37 = arith.constant 0 : index
    %116 = vector.load %arg2[%c960, %c0_37] : memref<1296x256xbf16, #tpu.memory_space<vmem>>, vector<1x256xbf16>
    %117 = arith.extf %116 : vector<1x256xbf16> to vector<1x256xf32>
    %118 = vector.broadcast %117 : vector<1x256xf32> to vector<2x256xf32>
    %119 = arith.addf %115, %118 : vector<2x256xf32>
    %120 = vector.extract_strided_slice %119 {offsets = [0, 0], sizes = [2, 128], strides = [1, 1]} : vector<2x256xf32> to vector<2x128xf32>
    %121 = vector.extract_strided_slice %119 {offsets = [0, 128], sizes = [2, 128], strides = [1, 1]} : vector<2x256xf32> to vector<2x128xf32>
    %122 = arith.negf %121 : vector<2x128xf32>
    %123 = math.exp %122 : vector<2x128xf32>
    %cst_38 = arith.constant 1.000000e+00 : f32
    %124 = vector.broadcast %cst_38 : f32 to vector<2x128xf32>
    %125 = arith.addf %124, %123 : vector<2x128xf32>
    %126 = arith.divf %124, %125 : vector<2x128xf32>
    %127 = arith.mulf %120, %126 : vector<2x128xf32>
    %128 = vector.shape_cast %127 : vector<2x128xf32> to vector<2x1x128xf32>
    %129 = vector.shape_cast %128 : vector<2x1x128xf32> to vector<2x128xf32>
    %cst_39 = arith.constant dense<0.000000e+00> : vector<2xf32>
    %130 = vector.multi_reduction <add>, %129, %cst_39 [1] : vector<2x128xf32> to vector<2xf32>
    %131 = vector.shape_cast %130 : vector<2xf32> to vector<2x1xf32>
    %cst_40 = arith.constant 1.280000e+02 : f32
    %132 = vector.broadcast %cst_40 : f32 to vector<2x1xf32>
    %133 = arith.divf %131, %132 : vector<2x1xf32>
    %134 = vector.broadcast %133 : vector<2x1xf32> to vector<2x128xf32>
    %135 = arith.subf %129, %134 : vector<2x128xf32>
    %136 = arith.mulf %135, %135 : vector<2x128xf32>
    %cst_41 = arith.constant dense<0.000000e+00> : vector<2xf32>
    %137 = vector.multi_reduction <add>, %136, %cst_41 [1] : vector<2x128xf32> to vector<2xf32>
    %138 = vector.shape_cast %137 : vector<2xf32> to vector<2x1xf32>
    %cst_42 = arith.constant 1.280000e+02 : f32
    %139 = vector.broadcast %cst_42 : f32 to vector<2x1xf32>
    %140 = arith.divf %138, %139 : vector<2x1xf32>
    %c976 = arith.constant 976 : index
    %c0_43 = arith.constant 0 : index
    %141 = vector.load %arg2[%c976, %c0_43] : memref<1296x256xbf16, #tpu.memory_space<vmem>>, vector<1x128xbf16>
    %142 = arith.extf %141 : vector<1x128xbf16> to vector<1x128xf32>
    %c992 = arith.constant 992 : index
    %c0_44 = arith.constant 0 : index
    %143 = vector.load %arg2[%c992, %c0_44] : memref<1296x256xbf16, #tpu.memory_space<vmem>>, vector<1x128xbf16>
    %144 = arith.extf %143 : vector<1x128xbf16> to vector<1x128xf32>
    %145 = vector.broadcast %133 : vector<2x1xf32> to vector<2x128xf32>
    %146 = arith.subf %129, %145 : vector<2x128xf32>
    %cst_45 = arith.constant 9.99999974E-6 : f32
    %147 = vector.broadcast %cst_45 : f32 to vector<2x1xf32>
    %148 = arith.addf %140, %147 : vector<2x1xf32>
    %149 = math.rsqrt %148 : vector<2x1xf32>
    %150 = vector.broadcast %149 : vector<2x1xf32> to vector<2x128xf32>
    %151 = arith.mulf %146, %150 : vector<2x128xf32>
    %152 = vector.broadcast %142 : vector<1x128xf32> to vector<2x128xf32>
    %153 = arith.mulf %151, %152 : vector<2x128xf32>
    %154 = vector.broadcast %144 : vector<1x128xf32> to vector<2x128xf32>
    %155 = arith.addf %153, %154 : vector<2x128xf32>
    %156 = arith.truncf %155 : vector<2x128xf32> to vector<2x128xbf16>
    %c1008 = arith.constant 1008 : index
    %c0_46 = arith.constant 0 : index
    %157 = vector.load %arg2[%c1008, %c0_46] : memref<1296x256xbf16, #tpu.memory_space<vmem>>, vector<128x128xbf16>
    %cst_47 = arith.constant dense<0.000000e+00> : vector<2x128xf32>
    %158 = tpu.matmul %156, %157, %cst_47 {dimension_numbers = #tpu.dot_dimension_numbers<[1], [0], [0], [1], [0, 0, 1, 1], [], []>} : vector<2x128xbf16>, vector<128x128xbf16>, vector<2x128xf32> -> vector<2x128xf32>
    %c1136 = arith.constant 1136 : index
    %c0_48 = arith.constant 0 : index
    %159 = vector.load %arg2[%c1136, %c0_48] : memref<1296x256xbf16, #tpu.memory_space<vmem>>, vector<1x128xbf16>
    %160 = arith.extf %159 : vector<1x128xbf16> to vector<1x128xf32>
    %161 = vector.broadcast %160 : vector<1x128xf32> to vector<2x128xf32>
    %162 = arith.addf %158, %161 : vector<2x128xf32>
    %163 = arith.negf %162 : vector<2x128xf32>
    %164 = math.exp %163 : vector<2x128xf32>
    %cst_49 = arith.constant 1.000000e+00 : f32
    %165 = vector.broadcast %cst_49 : f32 to vector<2x128xf32>
    %166 = arith.addf %165, %164 : vector<2x128xf32>
    %167 = arith.divf %165, %166 : vector<2x128xf32>
    %168 = arith.truncf %167 : vector<2x128xf32> to vector<2x128xbf16>
    %c1152 = arith.constant 1152 : index
    %c0_50 = arith.constant 0 : index
    %169 = vector.load %arg2[%c1152, %c0_50] : memref<1296x256xbf16, #tpu.memory_space<vmem>>, vector<128x128xbf16>
    %cst_51 = arith.constant dense<0.000000e+00> : vector<2x128xf32>
    %170 = tpu.matmul %168, %169, %cst_51 {dimension_numbers = #tpu.dot_dimension_numbers<[1], [0], [0], [1], [0, 0, 1, 1], [], []>} : vector<2x128xbf16>, vector<128x128xbf16>, vector<2x128xf32> -> vector<2x128xf32>
    %c1280 = arith.constant 1280 : index
    %c0_52 = arith.constant 0 : index
    %171 = vector.load %arg2[%c1280, %c0_52] : memref<1296x256xbf16, #tpu.memory_space<vmem>>, vector<1x128xbf16>
    %172 = arith.extf %171 : vector<1x128xbf16> to vector<1x128xf32>
    %173 = vector.broadcast %172 : vector<1x128xf32> to vector<2x128xf32>
    %174 = arith.addf %170, %173 : vector<2x128xf32>
    %c0_53 = arith.constant 0 : index
    %c0_54 = arith.constant 0 : index
    %c0_55 = arith.constant 0 : index
    %175 = vector.load %arg3[%c0_53, %c0_54, %c0_55] : memref<1x2x128xf32, #tpu.memory_space<vmem>>, vector<1x2x128xf32>
    %176 = vector.shape_cast %175 : vector<1x2x128xf32> to vector<2x128xf32>
    %177 = vector.shape_cast %174 : vector<2x128xf32> to vector<1x2x128xf32>
    tpu.vector_store %arg3[%c0_53, %c0_54, %c0_55], %177 {strides = array<i32>} : memref<1x2x128xf32, #tpu.memory_space<vmem>>, vector<1x2x128xf32>,
    return
  }
  func.func @transform_0(%arg0: i32) -> (i32, i32, i32) {
    %c0_i32 = arith.constant 0 : i32
    %c0_i32_0 = arith.constant 0 : i32
    %c0_i32_1 = arith.constant 0 : i32
    return %arg0, %c0_i32, %c0_i32_0 : i32, i32, i32
  }
  func.func @transform_1(%arg0: i32) -> (i32, i32) {
    %c0_i32 = arith.constant 0 : i32
    %c0_i32_0 = arith.constant 0 : i32
    %c0_i32_1 = arith.constant 0 : i32
    return %c0_i32, %c0_i32_0 : i32, i32
  }
  func.func @transform_2(%arg0: i32) -> (i32, i32, i32) {
    %c0_i32 = arith.constant 0 : i32
    %c0_i32_0 = arith.constant 0 : i32
    %c0_i32_1 = arith.constant 0 : i32
    return %arg0, %c0_i32, %c0_i32_0 : i32, i32, i32
  }
}

</mosaic_0001>

<llo_original>
// kernel: fwd.1
$region0: #{fwd.1}
  #allocation0 [shape = 'u32[]', space=smem, size = 0x4, offset = 0x4, fixed_abs, tag = 'smem constant byte address 0x4 - core index']
  #allocation1 [shape = 'u32[144,128]{1,0:T(1,128)}', space=vmem, size = 0x12000, scoped, tag = 'internal scratch']
  %s0 = inlined_call_operand.hbm [shape: f32[2,8,16], index: 0, kind: input, shape index: {}]
  %s1 = inlined_call_operand.hbm [shape: bf16[1296,256], index: 1, kind: input, shape index: {}]
  %s2 = inlined_call_operand.hbm [shape: f32[1,2,128], index: 2, kind: output, shape index: {}]
  %s3 = sld [smem:[#allocation0]]
  $region26: #{fwd.1} parent=0
    _
  %s5 = ssub.s32 1, %s3
  %s6 = scalar_select 0, %s5, %s3
  $region1: #{fwd.1} parent=0
    #allocation2 [shape = 'u8[8192]{0}', space=vmem, size = 0x2000, scoped, tag = 'input window, operand 0, single buffered']
    #allocation3 [shape = 's32[1]{0}', space=sflag, size = 0x4, scoped, tag = 'scoped memory for fwd.1']
    #allocation4 [shape = 's32[1]{0}', space=sflag, size = 0x4, scoped, tag = 'scoped memory for fwd.1']
    #allocation5 [shape = 'u8[663552]{0}', space=vmem, size = 0xa2000, scoped, tag = 'input window, operand 1, single buffered']
    #allocation6 [shape = 's32[1]{0}', space=sflag, size = 0x4, scoped, tag = 'scoped memory for fwd.1']
    #allocation7 [shape = 'u8[1024]{0}', space=vmem, size = 0x400, scoped, tag = 'output window, operand 0, single buffered']
    %7 = vsyncpa [#allocation3], 0
    %8 = vsyncpa [#allocation6], 0
    %9 = vsyncpa [#allocation4], 0
    // Predicated region
    $region2: #{fwd.1} parent=1 // pred_check
      _
    $region3: #{fwd.1} parent=1 // pred_check_branch
      %11 = sbr.rel (0) target = $region5
    $region4: #{fwd.1} parent=1 // pred_region
      %s13 = ssub.s32 256, 256
      %14 = vsyncadd [#allocation3], %s13
      %s15 = sshll.u32 [#allocation2], 4
      %s16 = int_to_ptr.vmem [resolvable:$true] %s15
      %21 = dma.hbm_to_vmem [thread:$0]  %s0, 256, %s16, [#allocation3], 128, 128, 8
    $region5: #{fwd.1} parent=1 // pred_fallthru
      _
    // Predicated region
    $region6: #{fwd.1} parent=1 // pred_check
      _
    $region7: #{fwd.1} parent=1 // pred_check_branch
      %23 = sbr.rel (0) target = $region9
    $region8: #{fwd.1} parent=1 // pred_region
      %s25 = ssub.s32 20736, 20736
      %26 = vsyncadd [#allocation6], %s25
      %s27 = sshll.u32 [#allocation5], 4
      %s28 = int_to_ptr.vmem [resolvable:$true] %s27
      %33 = dma.hbm_to_vmem [thread:$0]  %s1, 20736, %s28, [#allocation6], 128, 128, 8
    $region9: #{fwd.1} parent=1 // pred_fallthru
      _
    // Predicated region
    $region10: #{fwd.1} parent=1 // pred_check
      _
    $region11: #{fwd.1} parent=1 // pred_check_branch
      %35 = sbr.rel (0) target = $region13
    $region12: #{fwd.1} parent=1 // pred_region
      %36 = dma.done [#allocation3], 256
    $region13: #{fwd.1} parent=1 // pred_fallthru
      _
    // Predicated region
    $region14: #{fwd.1} parent=1 // pred_check
      _
    $region15: #{fwd.1} parent=1 // pred_check_branch
      %38 = sbr.rel (0) target = $region17
    $region16: #{fwd.1} parent=1 // pred_region
      %39 = dma.done [#allocation6], 20736
    $region17: #{fwd.1} parent=1 // pred_fallthru
      _
    %v41 = vld [vmem:[#allocation2] sm:$0xff]
    %v42 = vld [vmem:[#allocation2 + $0x8] sm:$0xff]
    %v43 = vpack.c.bf16 %v41, %v41
    %v44 = vpack.c.bf16 %v42, %v42
    %v48 = vunpack.c.l.s4 1966171168
    %v49 = vunpack.c.0.s8 %v48
    %v50 = vlaneseq
    %v51 = vshrl.u32 %v50, 7
    %v52 = vsub.s32 %v49, %v51
    %v53 = vrot.slane %v43, %v52
    %v54 = vcombine.high %v53, %v53
    %v56 = vunpack.c.l.s4 1966171168
    %v57 = vunpack.c.0.s8 %v56
    %v58 = vlaneseq
    %v59 = vshrl.u32 %v58, 7
    %v60 = vsub.s32 %v57, %v59
    %v61 = vrot.slane %v53, %v60
    %v63 = vunpack.c.l.s4 1966171168
    %v64 = vunpack.c.0.s8 %v63
    %v65 = vlaneseq
    %v66 = vshrl.u32 %v65, 7
    %v67 = vsub.s32 %v64, %v66
    %v68 = vrot.slane %v54, %v67
    %v69 = vcombine.high %v61, %v61
    %v71 = vunpack.c.l.s4 1966171168
    %v72 = vunpack.c.0.s8 %v71
    %v73 = vlaneseq
    %v74 = vshrl.u32 %v73, 7
    %v75 = vsub.s32 %v72, %v74
    %v76 = vrot.slane %v44, %v75
    %v77 = vcombine.high %v76, %v76
    %v79 = vunpack.c.l.s4 1966171168
    %v80 = vunpack.c.0.s8 %v79
    %v81 = vlaneseq
    %v82 = vshrl.u32 %v81, 7
    %v83 = vsub.s32 %v80, %v82
    %v84 = vrot.slane %v76, %v83
    %v86 = vunpack.c.l.s4 1966171168
    %v87 = vunpack.c.0.s8 %v86
    %v88 = vlaneseq
    %v89 = vshrl.u32 %v88, 7
    %v90 = vsub.s32 %v87, %v89
    %v91 = vrot.slane %v77, %v90
    %v92 = vcombine.high %v84, %v84
    %v93 = vld [vmem:[#allocation5] sm:$0xff]
    %v94 = vld [vmem:[#allocation5 + $0x8] sm:$0xff]
    %v95 = vcombine.high %v68, %v68
    %v96 = vcombine.high %v91, %v91
    %vm97 = vsmask.f32 256
    %vm98 = vsmask.f32 1284
    %vm99 = vmor %vm97, %vm98
    %vm100 = vsmask.f32 2312
    %vm101 = vmor %vm99, %vm100
    %vm102 = vsmask.f32 3340
    %vm103 = vmor %vm101, %vm102
    %vm104 = vsmask.f32 4368
    %vm105 = vmor %vm103, %vm104
    %vm106 = vsmask.f32 5396
    %vm107 = vmor %vm105, %vm106
    %vm108 = vsmask.f32 6424
    %vm109 = vmor %vm107, %vm108
    %vm110 = vsmask.f32 7452
    %vm111 = vmor %vm109, %vm110
    %v113 = vshrl.u32 %v61, 16
    %v115 = vrot.slane %v113, 7
    %v116 = vrot.slane %v115, 1
    %v118 = vshll.u32 %v68, 16
    %v120 = vsel %vm111, %v116, %v118
    %v121 = vshrl.u32 %v68, 16
    %v123 = vrot.slane %v121, 7
    %v124 = vrot.slane %v123, 1
    %v126 = vshll.u32 %v69, 16
    %v128 = vsel %vm111, %v124, %v126
    %v129 = vshrl.u32 %v69, 16
    %v131 = vrot.slane %v129, 7
    %v132 = vrot.slane %v131, 1
    %v134 = vshll.u32 %v95, 16
    %v136 = vsel %vm111, %v132, %v134
    %v138 = vshrl.u32 %v84, 16
    %v140 = vrot.slane %v138, 7
    %v141 = vrot.slane %v140, 1
    %v143 = vshll.u32 %v91, 16
    %v145 = vsel %vm111, %v141, %v143
    %v146 = vshrl.u32 %v91, 16
    %v148 = vrot.slane %v146, 7
    %v149 = vrot.slane %v148, 1
    %v151 = vshll.u32 %v92, 16
    %v153 = vsel %vm111, %v149, %v151
    %v154 = vshrl.u32 %v92, 16
    %v156 = vrot.slane %v154, 7
    %v157 = vrot.slane %v156, 1
    %v159 = vshll.u32 %v96, 16
    %v161 = vsel %vm111, %v157, %v159
    %v162 = vld [vmem:[#allocation5 + $0x10] sm:$0xff]
    %v163 = vld [vmem:[#allocation5 + $0x18] sm:$0xff]
    %v164 = vcombine.low %v120, %v128
    %v165 = vcombine.low %v136, %v145
    %v166 = vcombine.low %v153, %v161
    %v168 = vunpack.c.l.s4 1966171168
    %v169 = vunpack.c.0.s8 %v168
    %v170 = vlaneseq
    %v171 = vshrl.u32 %v170, 7
    %v172 = vsub.s32 %v169, %v171
    %v173 = vrot.slane %v164, %v172
    %v175 = vunpack.c.l.s4 1966171168
    %v176 = vunpack.c.0.s8 %v175
    %v177 = vlaneseq
    %v178 = vshrl.u32 %v177, 7
    %v179 = vsub.s32 %v176, %v178
    %v180 = vrot.slane %v165, %v179
    %v182 = vunpack.c.l.s4 1966171168
    %v183 = vunpack.c.0.s8 %v182
    %v184 = vlaneseq
    %v185 = vshrl.u32 %v184, 7
    %v186 = vsub.s32 %v183, %v185
    %v187 = vrot.slane %v166, %v186
    %v188 = vcombine.low %v173, %v180
    %v190 = vunpack.c.l.s4 1966171168
    %v191 = vunpack.c.0.s8 %v190
    %v192 = vlaneseq
    %v193 = vshrl.u32 %v192, 7
    %v194 = vsub.s32 %v191, %v193
    %v195 = vrot.slane %v188, %v194
    %v197 = vunpack.c.l.s4 1966171168
    %v198 = vunpack.c.0.s8 %v197
    %v199 = vlaneseq
    %v200 = vshrl.u32 %v199, 7
    %v201 = vsub.s32 %v198, %v200
    %v202 = vrot.slane %v187, %v201
    %v203 = vcombine.low %v195, %v202
    %v206 = vunpack.c.l.b16 %v162
    %v207 = vunpack.c.h.b16 %v162
    %v208 = vunpack.c.l.b16 %v163
    %v209 = vunpack.c.h.b16 %v163
    %v210 = vpack.c.b16 %v208, %v206
    %v211 = vpack.c.b16 %v209, %v207
    %vm214 = vcmask 130048
    %v216 = vsel %vm214, %v203, 0
    %218 = vmatprep.subr.bf16.mxu0 0
    %219 = vmatpush1.bf16.msra.mxu0 0
    %220 = vmatprep.subr.bf16.mxu0 0
    %221 = vmatpush1.bf16.msra.mxu0 0
    %222 = vmatprep.subr.bf16.mxu0 0
    %223 = vmatpush1.bf16.msra.mxu0 0
    %224 = vmatprep.subr.bf16.mxu0 0
    %225 = vmatpush1.bf16.msra.mxu0 0
    %226 = vmatprep.subr.bf16.mxu0 0
    %227 = vmatpush1.bf16.msra.mxu0 0
    %228 = vmatprep.subr.bf16.mxu0 0
    %229 = vmatpush1.bf16.msra.mxu0 0
    %230 = vmatprep.subr.bf16.mxu0 0
    %231 = vmatpush1.bf16.msra.mxu0 0
    %232 = vmatprep.subr.bf16.mxu0 %v211
    %233 = vmatpush1.bf16.msra.mxu0 %v210
    %234 = vmatprep.subr.bf16.mxu0 0
    %235 = vmatpush2.bf16.msra.mxu0 0
    %236 = vmatprep.subr.bf16.mxu0 0
    %237 = vmatpush2.bf16.msra.mxu0 0
    %238 = vmatprep.subr.bf16.mxu0 0
    %239 = vmatpush2.bf16.msra.mxu0 0
    %240 = vmatprep.subr.bf16.mxu0 0
    %241 = vmatpush2.bf16.msra.mxu0 0
    %242 = vmatprep.subr.bf16.mxu0 0
    %243 = vmatpush2.bf16.msra.mxu0 0
    %244 = vmatprep.subr.bf16.mxu0 0
    %245 = vmatpush2.bf16.msra.mxu0 0
    %246 = vmatprep.subr.bf16.mxu0 0
    %247 = vmatpush2.bf16.msra.mxu0 0
    %248 = vmatprep.subr.bf16.mxu0 0
    %249 = vmatpush2.bf16.msra.mxu0 0
    %250 = vmatprep.mubr.bf16.mxu0 0
    %251 = vmatmul.mubr.bf16.gmra.mxu0 %v216
    %v252 = vpop.f32.mrf.mxu0
    %v253 = vadd.f32 0.0, %v252
    %v254 = vpop.f32.mrf.mxu0
    %v255 = vadd.f32 0.0, %v254
    %v256 = vpop.f32.mrf.mxu0
    %v257 = vadd.f32 0.0, %v256
    %v258 = vpop.f32.mrf.mxu0
    %v259 = vadd.f32 0.0, %v258
    %260 = vdwg.mxu0
    %v261 = vcombine.low %v61, %v68
    %v262 = vcombine.low %v69, %v84
    %v263 = vcombine.low %v91, %v92
    %v265 = vunpack.c.l.s4 1966171168
    %v266 = vunpack.c.0.s8 %v265
    %v267 = vlaneseq
    %v268 = vshrl.u32 %v267, 7
    %v269 = vsub.s32 %v266, %v268
    %v270 = vrot.slane %v261, %v269
    %v272 = vunpack.c.l.s4 1966171168
    %v273 = vunpack.c.0.s8 %v272
    %v274 = vlaneseq
    %v275 = vshrl.u32 %v274, 7
    %v276 = vsub.s32 %v273, %v275
    %v277 = vrot.slane %v262, %v276
    %v279 = vunpack.c.l.s4 1966171168
    %v280 = vunpack.c.0.s8 %v279
    %v281 = vlaneseq
    %v282 = vshrl.u32 %v281, 7
    %v283 = vsub.s32 %v280, %v282
    %v284 = vrot.slane %v263, %v283
    %v285 = vcombine.low %v270, %v277
    %v287 = vunpack.c.l.s4 1966171168
    %v288 = vunpack.c.0.s8 %v287
    %v289 = vlaneseq
    %v290 = vshrl.u32 %v289, 7
    %v291 = vsub.s32 %v288, %v290
    %v292 = vrot.slane %v285, %v291
    %v294 = vunpack.c.l.s4 1966171168
    %v295 = vunpack.c.0.s8 %v294
    %v296 = vlaneseq
    %v297 = vshrl.u32 %v296, 7
    %v298 = vsub.s32 %v295, %v297
    %v299 = vrot.slane %v284, %v298
    %v300 = vcombine.low %v292, %v299
    %v303 = vunpack.c.l.b16 %v93
    %v304 = vunpack.c.h.b16 %v93
    %v305 = vunpack.c.l.b16 %v94
    %v306 = vunpack.c.h.b16 %v94
    %v307 = vpack.c.b16 %v305, %v303
    %v308 = vpack.c.b16 %v306, %v304
    %v312 = vsel %vm214, %v300, 0
    %314 = vmatprep.subr.bf16.mxu0 0
    %315 = vmatpush1.bf16.msra.mxu0 0
    %316 = vmatprep.subr.bf16.mxu0 0
    %317 = vmatpush1.bf16.msra.mxu0 0
    %318 = vmatprep.subr.bf16.mxu0 0
    %319 = vmatpush1.bf16.msra.mxu0 0
    %320 = vmatprep.subr.bf16.mxu0 0
    %321 = vmatpush1.bf16.msra.mxu0 0
    %322 = vmatprep.subr.bf16.mxu0 0
    %323 = vmatpush1.bf16.msra.mxu0 0
    %324 = vmatprep.subr.bf16.mxu0 0
    %325 = vmatpush1.bf16.msra.mxu0 0
    %326 = vmatprep.subr.bf16.mxu0 0
    %327 = vmatpush1.bf16.msra.mxu0 0
    %328 = vmatprep.subr.bf16.mxu0 %v308
    %329 = vmatpush1.bf16.msra.mxu0 %v307
    %330 = vmatprep.subr.bf16.mxu0 0
    %331 = vmatpush2.bf16.msra.mxu0 0
    %332 = vmatprep.subr.bf16.mxu0 0
    %333 = vmatpush2.bf16.msra.mxu0 0
    %334 = vmatprep.subr.bf16.mxu0 0
    %335 = vmatpush2.bf16.msra.mxu0 0
    %336 = vmatprep.subr.bf16.mxu0 0
    %337 = vmatpush2.bf16.msra.mxu0 0
    %338 = vmatprep.subr.bf16.mxu0 0
    %339 = vmatpush2.bf16.msra.mxu0 0
    %340 = vmatprep.subr.bf16.mxu0 0
    %341 = vmatpush2.bf16.msra.mxu0 0
    %342 = vmatprep.subr.bf16.mxu0 0
    %343 = vmatpush2.bf16.msra.mxu0 0
    %344 = vmatprep.subr.bf16.mxu0 0
    %345 = vmatpush2.bf16.msra.mxu0 0
    %346 = vmatprep.mubr.bf16.mxu0 0
    %347 = vmatmul.mubr.bf16.gmra.mxu0 %v312
    %v348 = vpop.f32.mrf.mxu0
    %v349 = vadd.f32 %v253, %v348
    %v350 = vpop.f32.mrf.mxu0
    %v351 = vadd.f32 %v255, %v350
    %v352 = vpop.f32.mrf.mxu0
    %v353 = vadd.f32 %v257, %v352
    %v354 = vpop.f32.mrf.mxu0
    %v355 = vadd.f32 %v259, %v354
    %356 = vdwg.mxu0
    %v357 = vld [vmem:[#allocation5 + $0x20] sm:$0xff]
    %v358 = vld [vmem:[#allocation5 + $0x28] sm:$0xff]
    %v359 = vcombine.low %v68, %v69
    %v360 = vcombine.low %v95, %v91
    %v361 = vcombine.low %v92, %v96
    %v363 = vunpack.c.l.s4 1966171168
    %v364 = vunpack.c.0.s8 %v363
    %v365 = vlaneseq
    %v366 = vshrl.u32 %v365, 7
    %v367 = vsub.s32 %v364, %v366
    %v368 = vrot.slane %v359, %v367
    %v370 = vunpack.c.l.s4 1966171168
    %v371 = vunpack.c.0.s8 %v370
    %v372 = vlaneseq
    %v373 = vshrl.u32 %v372, 7
    %v374 = vsub.s32 %v371, %v373
    %v375 = vrot.slane %v360, %v374
    %v377 = vunpack.c.l.s4 1966171168
    %v378 = vunpack.c.0.s8 %v377
    %v379 = vlaneseq
    %v380 = vshrl.u32 %v379, 7
    %v381 = vsub.s32 %v378, %v380
    %v382 = vrot.slane %v361, %v381
    %v383 = vcombine.low %v368, %v375
    %v385 = vunpack.c.l.s4 1966171168
    %v386 = vunpack.c.0.s8 %v385
    %v387 = vlaneseq
    %v388 = vshrl.u32 %v387, 7
    %v389 = vsub.s32 %v386, %v388
    %v390 = vrot.slane %v383, %v389
    %v392 = vunpack.c.l.s4 1966171168
    %v393 = vunpack.c.0.s8 %v392
    %v394 = vlaneseq
    %v395 = vshrl.u32 %v394, 7
    %v396 = vsub.s32 %v393, %v395
    %v397 = vrot.slane %v382, %v396
    %v398 = vcombine.low %v390, %v397
    %v401 = vunpack.c.l.b16 %v357
    %v402 = vunpack.c.h.b16 %v357
    %v403 = vunpack.c.l.b16 %v358
    %v404 = vunpack.c.h.b16 %v358
    %v405 = vpack.c.b16 %v403, %v401
    %v406 = vpack.c.b16 %v404, %v402
    %v410 = vsel %vm214, %v398, 0
    %412 = vmatprep.subr.bf16.mxu0 0
    %413 = vmatpush1.bf16.msra.mxu0 0
    %414 = vmatprep.subr.bf16.mxu0 0
    %415 = vmatpush1.bf16.msra.mxu0 0
    %416 = vmatprep.subr.bf16.mxu0 0
    %417 = vmatpush1.bf16.msra.mxu0 0
    %418 = vmatprep.subr.bf16.mxu0 0
    %419 = vmatpush1.bf16.msra.mxu0 0
    %420 = vmatprep.subr.bf16.mxu0 0
    %421 = vmatpush1.bf16.msra.mxu0 0
    %422 = vmatprep.subr.bf16.mxu0 0
    %423 = vmatpush1.bf16.msra.mxu0 0
    %424 = vmatprep.subr.bf16.mxu0 0
    %425 = vmatpush1.bf16.msra.mxu0 0
    %426 = vmatprep.subr.bf16.mxu0 %v406
    %427 = vmatpush1.bf16.msra.mxu0 %v405
    %428 = vmatprep.subr.bf16.mxu0 0
    %429 = vmatpush2.bf16.msra.mxu0 0
    %430 = vmatprep.subr.bf16.mxu0 0
    %431 = vmatpush2.bf16.msra.mxu0 0
    %432 = vmatprep.subr.bf16.mxu0 0
    %433 = vmatpush2.bf16.msra.mxu0 0
    %434 = vmatprep.subr.bf16.mxu0 0
    %435 = vmatpush2.bf16.msra.mxu0 0
    %436 = vmatprep.subr.bf16.mxu0 0
    %437 = vmatpush2.bf16.msra.mxu0 0
    %438 = vmatprep.subr.bf16.mxu0 0
    %439 = vmatpush2.bf16.msra.mxu0 0
    %440 = vmatprep.subr.bf16.mxu0 0
    %441 = vmatpush2.bf16.msra.mxu0 0
    %442 = vmatprep.subr.bf16.mxu0 0
    %443 = vmatpush2.bf16.msra.mxu0 0
    %444 = vmatprep.mubr.bf16.mxu0 0
    %445 = vmatmul.mubr.bf16.gmra.mxu0 %v410
    %v446 = vpop.f32.mrf.mxu0
    %v447 = vadd.f32 0.0, %v446
    %v448 = vpop.f32.mrf.mxu0
    %v449 = vadd.f32 0.0, %v448
    %v450 = vpop.f32.mrf.mxu0
    %v451 = vadd.f32 0.0, %v450
    %v452 = vpop.f32.mrf.mxu0
    %v453 = vadd.f32 0.0, %v452
    %454 = vdwg.mxu0
    %v455 = vadd.f32 %v349, %v447
    %v456 = vadd.f32 %v351, %v449
    %v457 = vadd.f32 %v353, %v451
    %v458 = vadd.f32 %v355, %v453
    %v459 = vld [vmem:[#allocation5 + $0x30] sm:$0x11]
    %v460 = vunpack.c.l.bf16 %v459
    %v461 = vunpack.c.h.bf16 %v459
    %v462 = vlaneseq
    %v463 = vshrl.u32 %v462, 7
    %v464 = vsub.s32 0, %v463
    %v465 = vrot.slane %v460, %v464
    %v466 = vlaneseq
    %v467 = vshrl.u32 %v466, 7
    %v468 = vsub.s32 0, %v467
    %v469 = vrot.slane %v461, %v468
    %v470 = vadd.f32 %v455, %v465
    %v471 = vadd.f32 %v456, %v469
    %v472 = vadd.f32 %v457, %v465
    %v473 = vadd.f32 %v458, %v469
    %v474 = vxor.u32 %v471, 2147483648
    %v475 = vxor.u32 %v473, 2147483648
    %v476 = vmul.f32 %v474, 1.442695
    %v477 = vpow.pop %v476
    %v478 = vmul.f32 %v475, 1.442695
    %v479 = vpow.pop %v478
    %v480 = vadd.f32 %v477, 1.0
    %v481 = vadd.f32 %v479, 1.0
    %v482 = vrcp.pop %v480
    %v483 = vmul.f32 1.0, %v482
    %v484 = vrcp.pop %v481
    %v485 = vmul.f32 1.0, %v484
    %v486 = vmul.f32 %v470, %v483
    %v487 = vmul.f32 %v472, %v485
    %v488 = vpack.c.bf16 %v487, %v486
    %v489 = vld [vmem:[#allocation5 + $0x40] sm:$0xf]
    %v490 = vld [vmem:[#allocation5 + $0x48] sm:$0xf]
    %v491 = vld [vmem:[#allocation5 + $0x50] sm:$0xf]
    %v492 = vld [vmem:[#allocation5 + $0x58] sm:$0xf]
    %v493 = vld [vmem:[#allocation5 + $0x60] sm:$0xf]
    %v494 = vld [vmem:[#allocation5 + $0x68] sm:$0xf]
    %v495 = vld [vmem:[#allocation5 + $0x70] sm:$0xf]
    %v496 = vld [vmem:[#allocation5 + $0x78] sm:$0xf]
    %v497 = vld [vmem:[#allocation5 + $0x80] sm:$0xf]
    %v498 = vld [vmem:[#allocation5 + $0x88] sm:$0xf]
    %v499 = vld [vmem:[#allocation5 + $0x90] sm:$0xf]
    %v500 = vld [vmem:[#allocation5 + $0x98] sm:$0xf]
    %v501 = vld [vmem:[#allocation5 + $0xa0] sm:$0xf]
    %v502 = vld [vmem:[#allocation5 + $0xa8] sm:$0xf]
    %v503 = vld [vmem:[#allocation5 + $0xb0] sm:$0xf]
    %v504 = vld [vmem:[#allocation5 + $0xb8] sm:$0xf]
    %v505 = vld [vmem:[#allocation5 + $0xc0] sm:$0x1]
    %v506 = vunpack.c.l.bf16 %v505
    %v507 = vlaneseq
    %v508 = vshrl.u32 %v507, 7
    %v509 = vsub.s32 0, %v508
    %v510 = vrot.slane %v506, %v509
    %v527 = vunpack.c.l.b16 %v489
    %v528 = vunpack.c.l.b16 %v490
    %v529 = vunpack.c.l.b16 %v491
    %v530 = vunpack.c.l.b16 %v492
    %v531 = vunpack.c.l.b16 %v493
    %v532 = vunpack.c.l.b16 %v494
    %v533 = vunpack.c.l.b16 %v495
    %v534 = vunpack.c.l.b16 %v496
    %v535 = vunpack.c.l.b16 %v497
    %v536 = vunpack.c.l.b16 %v498
    %v537 = vunpack.c.l.b16 %v499
    %v538 = vunpack.c.l.b16 %v500
    %v539 = vunpack.c.l.b16 %v501
    %v540 = vunpack.c.l.b16 %v502
    %v541 = vunpack.c.l.b16 %v503
    %v542 = vunpack.c.l.b16 %v504
    %v543 = vpack.c.b16 %v528, %v527
    %v544 = vpack.c.b16 %v530, %v529
    %v545 = vpack.c.b16 %v532, %v531
    %v546 = vpack.c.b16 %v534, %v533
    %v547 = vpack.c.b16 %v536, %v535
    %v548 = vpack.c.b16 %v538, %v537
    %v549 = vpack.c.b16 %v540, %v539
    %v550 = vpack.c.b16 %v542, %v541
    %559 = vmatprep.subr.bf16.mxu0 0
    %560 = vmatpush1.bf16.msra.mxu0 %v550
    %561 = vmatprep.subr.bf16.mxu0 0
    %562 = vmatpush1.bf16.msra.mxu0 %v549
    %563 = vmatprep.subr.bf16.mxu0 0
    %564 = vmatpush1.bf16.msra.mxu0 %v548
    %565 = vmatprep.subr.bf16.mxu0 0
    %566 = vmatpush1.bf16.msra.mxu0 %v547
    %567 = vmatprep.subr.bf16.mxu0 0
    %568 = vmatpush1.bf16.msra.mxu0 %v546
    %569 = vmatprep.subr.bf16.mxu0 0
    %570 = vmatpush1.bf16.msra.mxu0 %v545
    %571 = vmatprep.subr.bf16.mxu0 0
    %572 = vmatpush1.bf16.msra.mxu0 %v544
    %573 = vmatprep.subr.bf16.mxu0 0
    %574 = vmatpush1.bf16.msra.mxu0 %v543
    %575 = vmatprep.subr.bf16.mxu0 0
    %576 = vmatpush2.bf16.msra.mxu0 0
    %577 = vmatprep.subr.bf16.mxu0 0
    %578 = vmatpush2.bf16.msra.mxu0 0
    %579 = vmatprep.subr.bf16.mxu0 0
    %580 = vmatpush2.bf16.msra.mxu0 0
    %581 = vmatprep.subr.bf16.mxu0 0
    %582 = vmatpush2.bf16.msra.mxu0 0
    %583 = vmatprep.subr.bf16.mxu0 0
    %584 = vmatpush2.bf16.msra.mxu0 0
    %585 = vmatprep.subr.bf16.mxu0 0
    %586 = vmatpush2.bf16.msra.mxu0 0
    %587 = vmatprep.subr.bf16.mxu0 0
    %588 = vmatpush2.bf16.msra.mxu0 0
    %589 = vmatprep.subr.bf16.mxu0 0
    %590 = vmatpush2.bf16.msra.mxu0 0
    %591 = vmatprep.mubr.bf16.mxu0 0
    %592 = vmatmul.mubr.bf16.gmra.mxu0 %v488
    %v593 = vpop.f32.mrf.mxu0
    %v594 = vadd.f32 %v510, %v593
    %v595 = vpop.f32.mrf.mxu0
    %v596 = vpop.f32.mrf.mxu0
    %v597 = vadd.f32 %v510, %v596
    %v598 = vpop.f32.mrf.mxu0
    %599 = vdwg.mxu0
    %v600 = vmax.f32 %v594, 0.0
    %v601 = vmax.f32 %v597, 0.0
    %v604 = vcombine.high %v600, %v600
    %v606 = vunpack.c.l.s4 1983009808
    %v607 = vunpack.c.0.s8 %v606
    %v608 = vlaneseq
    %v609 = vshrl.u32 %v608, 7
    %v610 = vsub.s32 %v607, %v609
    %v611 = vrot.slane %v600, %v610
    %v613 = vunpack.c.l.s4 1983009808
    %v614 = vunpack.c.0.s8 %v613
    %v615 = vlaneseq
    %v616 = vshrl.u32 %v615, 7
    %v617 = vsub.s32 %v614, %v616
    %v618 = vrot.slane %v604, %v617
    %v619 = vcombine.high %v611, %v611
    %v620 = vcombine.high %v618, %v618
    %v622 = vunpack.c.l.s4 1983009808
    %v623 = vunpack.c.0.s8 %v622
    %v624 = vlaneseq
    %v625 = vshrl.u32 %v624, 7
    %v626 = vsub.s32 %v623, %v625
    %v627 = vrot.slane %v601, %v626
    %v628 = vcombine.high %v627, %v627
    %v629 = vcombine.low %v611, %v619
    %v631 = vunpack.c.l.s4 1983009808
    %v632 = vunpack.c.0.s8 %v631
    %v633 = vlaneseq
    %v634 = vshrl.u32 %v633, 7
    %v635 = vsub.s32 %v632, %v634
    %v636 = vrot.slane %v629, %v635
    %v638 = vunpack.c.l.s4 1983009808
    %v639 = vunpack.c.0.s8 %v638
    %v640 = vlaneseq
    %v641 = vshrl.u32 %v640, 7
    %v642 = vsub.s32 %v639, %v641
    %v643 = vrot.slane %v618, %v642
    %v644 = vcombine.low %v636, %v643
    %v645 = vcombine.low %v620, %v627
    %v647 = vunpack.c.l.s4 1983009808
    %v648 = vunpack.c.0.s8 %v647
    %v649 = vlaneseq
    %v650 = vshrl.u32 %v649, 7
    %v651 = vsub.s32 %v648, %v650
    %v652 = vrot.slane %v645, %v651
    %v654 = vunpack.c.l.s4 1983009808
    %v655 = vunpack.c.0.s8 %v654
    %v656 = vlaneseq
    %v657 = vshrl.u32 %v656, 7
    %v658 = vsub.s32 %v655, %v657
    %v659 = vrot.slane %v628, %v658
    %v660 = vcombine.low %v652, %v659
    %v663 = vpack.c.bf16 %v644, %v644
    %v664 = vpack.c.bf16 %v660, %v660
    %v665 = vld [vmem:[#allocation5 + $0xd0] sm:$0xff]
    %v666 = vld [vmem:[#allocation5 + $0xd8] sm:$0xff]
    %v667 = vld [vmem:[#allocation5 + $0xe0] sm:$0xff]
    %v668 = vld [vmem:[#allocation5 + $0xe8] sm:$0xff]
    %v669 = vld [vmem:[#allocation5 + $0xf0] sm:$0xff]
    %v670 = vld [vmem:[#allocation5 + $0xf8] sm:$0xff]
    %v671 = vld [vmem:[#allocation5 + $0x100] sm:$0xff]
    %v672 = vld [vmem:[#allocation5 + $0x108] sm:$0xff]
    %v676 = vunpack.c.l.s4 1983009808
    %v677 = vunpack.c.0.s8 %v676
    %v678 = vlaneseq
    %v679 = vshrl.u32 %v678, 7
    %v680 = vsub.s32 %v677, %v679
    %v681 = vrot.slane %v663, %v680
    %v682 = vcombine.high %v681, %v681
    %v684 = vunpack.c.l.s4 1983009808
    %v685 = vunpack.c.0.s8 %v684
    %v686 = vlaneseq
    %v687 = vshrl.u32 %v686, 7
    %v688 = vsub.s32 %v685, %v687
    %v689 = vrot.slane %v664, %v688
    %v690 = vcombine.high %v689, %v689
    %vm691 = vsmask.f32 1280
    %vm692 = vsmask.f32 3336
    %vm693 = vmor %vm691, %vm692
    %vm694 = vsmask.f32 5392
    %vm695 = vmor %vm693, %vm694
    %vm696 = vsmask.f32 7448
    %vm697 = vmor %vm695, %vm696
    %v699 = vshrl.u32 %v681, 16
    %v701 = vrot.slane %v699, 6
    %v702 = vshll.u32 %v681, 16
    %v704 = vrot.slane %v702, 7
    %v705 = vor.u32 %v701, %v704
    %v706 = vrot.slane %v705, 2
    %v708 = vshll.u32 %v682, 16
    %v710 = vrot.slane %v708, 7
    %v711 = vsel %vm697, %v706, %v710
    %v713 = vshrl.u32 %v689, 16
    %v715 = vrot.slane %v713, 6
    %v716 = vshll.u32 %v689, 16
    %v718 = vrot.slane %v716, 7
    %v719 = vor.u32 %v715, %v718
    %v720 = vrot.slane %v719, 2
    %v722 = vshll.u32 %v690, 16
    %v724 = vrot.slane %v722, 7
    %v725 = vsel %vm697, %v720, %v724
    %v726 = vld [vmem:[#allocation5 + $0x110] sm:$0xff]
    %v727 = vld [vmem:[#allocation5 + $0x118] sm:$0xff]
    %v728 = vld [vmem:[#allocation5 + $0x120] sm:$0xff]
    %v729 = vld [vmem:[#allocation5 + $0x128] sm:$0xff]
    %v730 = vld [vmem:[#allocation5 + $0x130] sm:$0xff]
    %v731 = vld [vmem:[#allocation5 + $0x138] sm:$0xff]
    %v732 = vld [vmem:[#allocation5 + $0x140] sm:$0xff]
    %v733 = vld [vmem:[#allocation5 + $0x148] sm:$0xff]
    %v734 = vcombine.low %v711, %v725
    %v736 = vunpack.c.l.s4 1983009808
    %v737 = vunpack.c.0.s8 %v736
    %v738 = vlaneseq
    %v739 = vshrl.u32 %v738, 7
    %v740 = vsub.s32 %v737, %v739
    %v741 = vrot.slane %v734, %v740
    %v750 = vunpack.c.l.b16 %v726
    %v751 = vunpack.c.h.b16 %v726
    %v752 = vunpack.c.l.b16 %v727
    %v753 = vunpack.c.h.b16 %v727
    %v754 = vunpack.c.l.b16 %v728
    %v755 = vunpack.c.h.b16 %v728
    %v756 = vunpack.c.l.b16 %v729
    %v757 = vunpack.c.h.b16 %v729
    %v758 = vunpack.c.l.b16 %v730
    %v759 = vunpack.c.h.b16 %v730
    %v760 = vunpack.c.l.b16 %v731
    %v761 = vunpack.c.h.b16 %v731
    %v762 = vunpack.c.l.b16 %v732
    %v763 = vunpack.c.h.b16 %v732
    %v764 = vunpack.c.l.b16 %v733
    %v765 = vunpack.c.h.b16 %v733
    %v766 = vpack.c.b16 %v752, %v750
    %v767 = vpack.c.b16 %v753, %v751
    %v768 = vpack.c.b16 %v756, %v754
    %v769 = vpack.c.b16 %v757, %v755
    %v770 = vpack.c.b16 %v760, %v758
    %v771 = vpack.c.b16 %v761, %v759
    %v772 = vpack.c.b16 %v764, %v762
    %v773 = vpack.c.b16 %v765, %v763
    %vm782 = vcmask 523264
    %v784 = vsel %vm782, %v741, 0
    %786 = vmatprep.subr.bf16.mxu0 0
    %787 = vmatpush1.bf16.msra.mxu0 0
    %788 = vmatprep.subr.bf16.mxu0 0
    %789 = vmatpush1.bf16.msra.mxu0 0
    %790 = vmatprep.subr.bf16.mxu0 0
    %791 = vmatpush1.bf16.msra.mxu0 0
    %792 = vmatprep.subr.bf16.mxu0 0
    %793 = vmatpush1.bf16.msra.mxu0 0
    %794 = vmatprep.subr.bf16.mxu0 %v773
    %795 = vmatpush1.bf16.msra.mxu0 %v772
    %796 = vmatprep.subr.bf16.mxu0 %v771
    %797 = vmatpush1.bf16.msra.mxu0 %v770
    %798 = vmatprep.subr.bf16.mxu0 %v769
    %799 = vmatpush1.bf16.msra.mxu0 %v768
    %800 = vmatprep.subr.bf16.mxu0 %v767
    %801 = vmatpush1.bf16.msra.mxu0 %v766
    %802 = vmatprep.subr.bf16.mxu0 0
    %803 = vmatpush2.bf16.msra.mxu0 0
    %804 = vmatprep.subr.bf16.mxu0 0
    %805 = vmatpush2.bf16.msra.mxu0 0
    %806 = vmatprep.subr.bf16.mxu0 0
    %807 = vmatpush2.bf16.msra.mxu0 0
    %808 = vmatprep.subr.bf16.mxu0 0
    %809 = vmatpush2.bf16.msra.mxu0 0
    %810 = vmatprep.subr.bf16.mxu0 0
    %811 = vmatpush2.bf16.msra.mxu0 0
    %812 = vmatprep.subr.bf16.mxu0 0
    %813 = vmatpush2.bf16.msra.mxu0 0
    %814 = vmatprep.subr.bf16.mxu0 0
    %815 = vmatpush2.bf16.msra.mxu0 0
    %816 = vmatprep.subr.bf16.mxu0 0
    %817 = vmatpush2.bf16.msra.mxu0 0
    %818 = vmatprep.mubr.bf16.mxu0 0
    %819 = vmatmul.mubr.bf16.gmra.mxu0 %v784
    %v820 = vpop.f32.mrf.mxu0
    %v821 = vadd.f32 0.0, %v820
    %v822 = vpop.f32.mrf.mxu0
    %v823 = vadd.f32 0.0, %v822
    %v824 = vpop.f32.mrf.mxu0
    %v825 = vpop.f32.mrf.mxu0
    %826 = vdwg.mxu0
    %v827 = vcombine.low %v663, %v664
    %v829 = vunpack.c.l.s4 1983009808
    %v830 = vunpack.c.0.s8 %v829
    %v831 = vlaneseq
    %v832 = vshrl.u32 %v831, 7
    %v833 = vsub.s32 %v830, %v832
    %v834 = vrot.slane %v827, %v833
    %v843 = vunpack.c.l.b16 %v665
    %v844 = vunpack.c.h.b16 %v665
    %v845 = vunpack.c.l.b16 %v666
    %v846 = vunpack.c.h.b16 %v666
    %v847 = vunpack.c.l.b16 %v667
    %v848 = vunpack.c.h.b16 %v667
    %v849 = vunpack.c.l.b16 %v668
    %v850 = vunpack.c.h.b16 %v668
    %v851 = vunpack.c.l.b16 %v669
    %v852 = vunpack.c.h.b16 %v669
    %v853 = vunpack.c.l.b16 %v670
    %v854 = vunpack.c.h.b16 %v670
    %v855 = vunpack.c.l.b16 %v671
    %v856 = vunpack.c.h.b16 %v671
    %v857 = vunpack.c.l.b16 %v672
    %v858 = vunpack.c.h.b16 %v672
    %v859 = vpack.c.b16 %v845, %v843
    %v860 = vpack.c.b16 %v846, %v844
    %v861 = vpack.c.b16 %v849, %v847
    %v862 = vpack.c.b16 %v850, %v848
    %v863 = vpack.c.b16 %v853, %v851
    %v864 = vpack.c.b16 %v854, %v852
    %v865 = vpack.c.b16 %v857, %v855
    %v866 = vpack.c.b16 %v858, %v856
    %v876 = vsel %vm782, %v834, 0
    %878 = vmatprep.subr.bf16.mxu0 0
    %879 = vmatpush1.bf16.msra.mxu0 0
    %880 = vmatprep.subr.bf16.mxu0 0
    %881 = vmatpush1.bf16.msra.mxu0 0
    %882 = vmatprep.subr.bf16.mxu0 0
    %883 = vmatpush1.bf16.msra.mxu0 0
    %884 = vmatprep.subr.bf16.mxu0 0
    %885 = vmatpush1.bf16.msra.mxu0 0
    %886 = vmatprep.subr.bf16.mxu0 %v866
    %887 = vmatpush1.bf16.msra.mxu0 %v865
    %888 = vmatprep.subr.bf16.mxu0 %v864
    %889 = vmatpush1.bf16.msra.mxu0 %v863
    %890 = vmatprep.subr.bf16.mxu0 %v862
    %891 = vmatpush1.bf16.msra.mxu0 %v861
    %892 = vmatprep.subr.bf16.mxu0 %v860
    %893 = vmatpush1.bf16.msra.mxu0 %v859
    %894 = vmatprep.subr.bf16.mxu0 0
    %895 = vmatpush2.bf16.msra.mxu0 0
    %896 = vmatprep.subr.bf16.mxu0 0
    %897 = vmatpush2.bf16.msra.mxu0 0
    %898 = vmatprep.subr.bf16.mxu0 0
    %899 = vmatpush2.bf16.msra.mxu0 0
    %900 = vmatprep.subr.bf16.mxu0 0
    %901 = vmatpush2.bf16.msra.mxu0 0
    %902 = vmatprep.subr.bf16.mxu0 0
    %903 = vmatpush2.bf16.msra.mxu0 0
    %904 = vmatprep.subr.bf16.mxu0 0
    %905 = vmatpush2.bf16.msra.mxu0 0
    %906 = vmatprep.subr.bf16.mxu0 0
    %907 = vmatpush2.bf16.msra.mxu0 0
    %908 = vmatprep.subr.bf16.mxu0 0
    %909 = vmatpush2.bf16.msra.mxu0 0
    %910 = vmatprep.mubr.bf16.mxu0 0
    %911 = vmatmul.mubr.bf16.gmra.mxu0 %v876
    %v912 = vpop.f32.mrf.mxu0
    %v913 = vadd.f32 %v821, %v912
    %v914 = vpop.f32.mrf.mxu0
    %v915 = vadd.f32 %v823, %v914
    %v916 = vpop.f32.mrf.mxu0
    %v917 = vpop.f32.mrf.mxu0
    %918 = vdwg.mxu0
    %vm919 = vcmask 1040384
    %vm920 = vcmask 1042434
    %vm921 = vmor %vm919, %vm920
    %vm922 = vcmask 1044484
    %vm923 = vmor %vm921, %vm922
    %vm924 = vcmask 1046534
    %vm925 = vmor %vm923, %vm924
    %v926 = vrot.slane %v681, 7
    %v927 = vrot.slane %v926, 2
    %v928 = vrot.slane %v682, 7
    %v929 = vsel %vm925, %v927, %v928
    %v930 = vrot.slane %v689, 7
    %v931 = vrot.slane %v930, 2
    %v932 = vrot.slane %v690, 7
    %v933 = vsel %vm925, %v931, %v932
    %v934 = vld [vmem:[#allocation5 + $0x150] sm:$0xff]
    %v935 = vld [vmem:[#allocation5 + $0x158] sm:$0xff]
    %v936 = vld [vmem:[#allocation5 + $0x160] sm:$0xff]
    %v937 = vld [vmem:[#allocation5 + $0x168] sm:$0xff]
    %v938 = vld [vmem:[#allocation5 + $0x170] sm:$0xff]
    %v939 = vld [vmem:[#allocation5 + $0x178] sm:$0xff]
    %v940 = vld [vmem:[#allocation5 + $0x180] sm:$0xff]
    %v941 = vld [vmem:[#allocation5 + $0x188] sm:$0xff]
    %v942 = vcombine.low %v929, %v933
    %v944 = vunpack.c.l.s4 1983009808
    %v945 = vunpack.c.0.s8 %v944
    %v946 = vlaneseq
    %v947 = vshrl.u32 %v946, 7
    %v948 = vsub.s32 %v945, %v947
    %v949 = vrot.slane %v942, %v948
    %v958 = vunpack.c.l.b16 %v934
    %v959 = vunpack.c.h.b16 %v934
    %v960 = vunpack.c.l.b16 %v935
    %v961 = vunpack.c.h.b16 %v935
    %v962 = vunpack.c.l.b16 %v936
    %v963 = vunpack.c.h.b16 %v936
    %v964 = vunpack.c.l.b16 %v937
    %v965 = vunpack.c.h.b16 %v937
    %v966 = vunpack.c.l.b16 %v938
    %v967 = vunpack.c.h.b16 %v938
    %v968 = vunpack.c.l.b16 %v939
    %v969 = vunpack.c.h.b16 %v939
    %v970 = vunpack.c.l.b16 %v940
    %v971 = vunpack.c.h.b16 %v940
    %v972 = vunpack.c.l.b16 %v941
    %v973 = vunpack.c.h.b16 %v941
    %v974 = vpack.c.b16 %v960, %v958
    %v975 = vpack.c.b16 %v961, %v959
    %v976 = vpack.c.b16 %v964, %v962
    %v977 = vpack.c.b16 %v965, %v963
    %v978 = vpack.c.b16 %v968, %v966
    %v979 = vpack.c.b16 %v969, %v967
    %v980 = vpack.c.b16 %v972, %v970
    %v981 = vpack.c.b16 %v973, %v971
    %v991 = vsel %vm782, %v949, 0
    %993 = vmatprep.subr.bf16.mxu0 0
    %994 = vmatpush1.bf16.msra.mxu0 0
    %995 = vmatprep.subr.bf16.mxu0 0
    %996 = vmatpush1.bf16.msra.mxu0 0
    %997 = vmatprep.subr.bf16.mxu0 0
    %998 = vmatpush1.bf16.msra.mxu0 0
    %999 = vmatprep.subr.bf16.mxu0 0
    %1000 = vmatpush1.bf16.msra.mxu0 0
    %1001 = vmatprep.subr.bf16.mxu0 %v981
    %1002 = vmatpush1.bf16.msra.mxu0 %v980
    %1003 = vmatprep.subr.bf16.mxu0 %v979
    %1004 = vmatpush1.bf16.msra.mxu0 %v978
    %1005 = vmatprep.subr.bf16.mxu0 %v977
    %1006 = vmatpush1.bf16.msra.mxu0 %v976
    %1007 = vmatprep.subr.bf16.mxu0 %v975
    %1008 = vmatpush1.bf16.msra.mxu0 %v974
    %1009 = vmatprep.subr.bf16.mxu0 0
    %1010 = vmatpush2.bf16.msra.mxu0 0
    %1011 = vmatprep.subr.bf16.mxu0 0
    %1012 = vmatpush2.bf16.msra.mxu0 0
    %1013 = vmatprep.subr.bf16.mxu0 0
    %1014 = vmatpush2.bf16.msra.mxu0 0
    %1015 = vmatprep.subr.bf16.mxu0 0
    %1016 = vmatpush2.bf16.msra.mxu0 0
    %1017 = vmatprep.subr.bf16.mxu0 0
    %1018 = vmatpush2.bf16.msra.mxu0 0
    %1019 = vmatprep.subr.bf16.mxu0 0
    %1020 = vmatpush2.bf16.msra.mxu0 0
    %1021 = vmatprep.subr.bf16.mxu0 0
    %1022 = vmatpush2.bf16.msra.mxu0 0
    %1023 = vmatprep.subr.bf16.mxu0 0
    %1024 = vmatpush2.bf16.msra.mxu0 0
    %1025 = vmatprep.mubr.bf16.mxu0 0
    %1026 = vmatmul.mubr.bf16.gmra.mxu0 %v991
    %v1027 = vpop.f32.mrf.mxu0
    %v1028 = vadd.f32 0.0, %v1027
    %v1029 = vpop.f32.mrf.mxu0
    %v1030 = vadd.f32 0.0, %v1029
    %v1031 = vpop.f32.mrf.mxu0
    %v1032 = vpop.f32.mrf.mxu0
    %1033 = vdwg.mxu0
    %v1034 = vadd.f32 %v913, %v1028
    %v1035 = vadd.f32 %v915, %v1030
    %v1036 = vld [vmem:[#allocation5 + $0x190] sm:$0x11]
    %v1037 = vunpack.c.l.bf16 %v1036
    %v1038 = vunpack.c.h.bf16 %v1036
    %v1039 = vlaneseq
    %v1040 = vshrl.u32 %v1039, 7
    %v1041 = vsub.s32 0, %v1040
    %v1042 = vrot.slane %v1037, %v1041
    %v1043 = vlaneseq
    %v1044 = vshrl.u32 %v1043, 7
    %v1045 = vsub.s32 0, %v1044
    %v1046 = vrot.slane %v1038, %v1045
    %v1047 = vadd.f32 %v1034, %v1042
    %v1048 = vadd.f32 %v1035, %v1046
    %v1049 = vxor.u32 %v1048, 2147483648
    %v1050 = vmul.f32 %v1049, 1.442695
    %v1051 = vpow.pop %v1050
    %v1052 = vadd.f32 %v1051, 1.0
    %v1053 = vrcp.pop %v1052
    %v1054 = vmul.f32 1.0, %v1053
    %v1055 = vmul.f32 %v1047, %v1054
    %1056 = vadd.xlane.f32.xlu0 %v1055
    %v1057 = vpop.xlane.xlu0 %1056
    %v1058 = vrcp.pop 128.0
    %v1059 = vmul.f32 %v1057, %v1058
    %v1060 = vsub.f32 %v1055, %v1059
    %v1061 = vmul.f32 %v1060, %v1060
    %1062 = vadd.xlane.f32.xlu0 %v1061
    %v1063 = vpop.xlane.xlu0 %1062
    %v1064 = vmul.f32 %v1063, %v1058
    %v1065 = vld [vmem:[#allocation5 + $0x1a0] sm:$0x1]
    %v1066 = vunpack.c.l.bf16 %v1065
    %v1067 = vld [vmem:[#allocation5 + $0x1b0] sm:$0x1]
    %v1068 = vunpack.c.l.bf16 %v1067
    %v1069 = vadd.f32 %v1064, 1e-05
    %v1070 = vrsqrt.pop %v1069
    %v1071 = vmul.f32 %v1060, %v1070
    %v1072 = vlaneseq
    %v1073 = vshrl.u32 %v1072, 7
    %v1074 = vsub.s32 0, %v1073
    %v1075 = vrot.slane %v1066, %v1074
    %v1076 = vmul.f32 %v1071, %v1075
    %v1077 = vlaneseq
    %v1078 = vshrl.u32 %v1077, 7
    %v1079 = vsub.s32 0, %v1078
    %v1080 = vrot.slane %v1068, %v1079
    %v1081 = vadd.f32 %v1076, %v1080
    %v1083 = vcombine.high %v1081, %v1081
    %v1085 = vpack.c.bf16 %v1081, %v1081
    %v1086 = vpack.c.bf16 %v1083, %v1083
    %v1087 = vld [vmem:[#allocation5 + $0x1c0] sm:$0xff]
    %v1088 = vld [vmem:[#allocation5 + $0x1c8] sm:$0xff]
    %v1089 = vld [vmem:[#allocation5 + $0x1d0] sm:$0xff]
    %v1090 = vld [vmem:[#allocation5 + $0x1d8] sm:$0xff]
    %v1091 = vld [vmem:[#allocation5 + $0x1e0] sm:$0xff]
    %v1092 = vld [vmem:[#allocation5 + $0x1e8] sm:$0xff]
    %v1093 = vld [vmem:[#allocation5 + $0x1f0] sm:$0xff]
    %v1094 = vld [vmem:[#allocation5 + $0x1f8] sm:$0xff]
    %v1095 = vld [vmem:[#allocation5 + $0x200] sm:$0xff]
    %v1096 = vld [vmem:[#allocation5 + $0x208] sm:$0xff]
    %v1097 = vld [vmem:[#allocation5 + $0x210] sm:$0xff]
    %v1098 = vld [vmem:[#allocation5 + $0x218] sm:$0xff]
    %v1099 = vld [vmem:[#allocation5 + $0x220] sm:$0xff]
    %v1100 = vld [vmem:[#allocation5 + $0x228] sm:$0xff]
    %v1101 = vld [vmem:[#allocation5 + $0x230] sm:$0xff]
    %v1102 = vld [vmem:[#allocation5 + $0x238] sm:$0xff]
    %v1103 = vld [vmem:[#allocation5 + $0x240] sm:$0xff]
    %v1104 = vld [vmem:[#allocation5 + $0x248] sm:$0xff]
    %v1105 = vld [vmem:[#allocation5 + $0x250] sm:$0xff]
    %v1106 = vld [vmem:[#allocation5 + $0x258] sm:$0xff]
    %v1107 = vld [vmem:[#allocation5 + $0x260] sm:$0xff]
    %v1108 = vld [vmem:[#allocation5 + $0x268] sm:$0xff]
    %v1109 = vld [vmem:[#allocation5 + $0x270] sm:$0xff]
    %v1110 = vld [vmem:[#allocation5 + $0x278] sm:$0xff]
    %v1111 = vld [vmem:[#allocation5 + $0x280] sm:$0xff]
    %v1112 = vld [vmem:[#allocation5 + $0x288] sm:$0xff]
    %v1113 = vld [vmem:[#allocation5 + $0x290] sm:$0xff]
    %v1114 = vld [vmem:[#allocation5 + $0x298] sm:$0xff]
    %v1115 = vld [vmem:[#allocation5 + $0x2a0] sm:$0xff]
    %v1116 = vld [vmem:[#allocation5 + $0x2a8] sm:$0xff]
    %v1117 = vld [vmem:[#allocation5 + $0x2b0] sm:$0xff]
    %v1118 = vld [vmem:[#allocation5 + $0x2b8] sm:$0xff]
    %v1121 = vunpack.c.l.b16 %v1085
    %v1122 = vunpack.c.l.b16 %v1086
    %v1123 = vrot.slane %v1121, 1
    %vm1124 = vcmask 1041409
    %v1125 = vsel %vm1124, %v1122, %v1123
    %v1126 = vpack.c.b16 %v1125, %v1125
    %v1144 = vunpack.c.l.b16 %v1103
    %v1145 = vunpack.c.h.b16 %v1103
    %v1146 = vunpack.c.l.b16 %v1104
    %v1147 = vunpack.c.h.b16 %v1104
    %v1148 = vunpack.c.l.b16 %v1105
    %v1149 = vunpack.c.h.b16 %v1105
    %v1150 = vunpack.c.l.b16 %v1106
    %v1151 = vunpack.c.h.b16 %v1106
    %v1152 = vunpack.c.l.b16 %v1107
    %v1153 = vunpack.c.h.b16 %v1107
    %v1154 = vunpack.c.l.b16 %v1108
    %v1155 = vunpack.c.h.b16 %v1108
    %v1156 = vunpack.c.l.b16 %v1109
    %v1157 = vunpack.c.h.b16 %v1109
    %v1158 = vunpack.c.l.b16 %v1110
    %v1159 = vunpack.c.h.b16 %v1110
    %v1160 = vunpack.c.l.b16 %v1111
    %v1161 = vunpack.c.h.b16 %v1111
    %v1162 = vunpack.c.l.b16 %v1112
    %v1163 = vunpack.c.h.b16 %v1112
    %v1164 = vunpack.c.l.b16 %v1113
    %v1165 = vunpack.c.h.b16 %v1113
    %v1166 = vunpack.c.l.b16 %v1114
    %v1167 = vunpack.c.h.b16 %v1114
    %v1168 = vunpack.c.l.b16 %v1115
    %v1169 = vunpack.c.h.b16 %v1115
    %v1170 = vunpack.c.l.b16 %v1116
    %v1171 = vunpack.c.h.b16 %v1116
    %v1172 = vunpack.c.l.b16 %v1117
    %v1173 = vunpack.c.h.b16 %v1117
    %v1174 = vunpack.c.l.b16 %v1118
    %v1175 = vunpack.c.h.b16 %v1118
    %v1176 = vpack.c.b16 %v1146, %v1144
    %v1177 = vpack.c.b16 %v1147, %v1145
    %v1178 = vpack.c.b16 %v1150, %v1148
    %v1179 = vpack.c.b16 %v1151, %v1149
    %v1180 = vpack.c.b16 %v1154, %v1152
    %v1181 = vpack.c.b16 %v1155, %v1153
    %v1182 = vpack.c.b16 %v1158, %v1156
    %v1183 = vpack.c.b16 %v1159, %v1157
    %v1184 = vpack.c.b16 %v1162, %v1160
    %v1185 = vpack.c.b16 %v1163, %v1161
    %v1186 = vpack.c.b16 %v1166, %v1164
    %v1187 = vpack.c.b16 %v1167, %v1165
    %v1188 = vpack.c.b16 %v1170, %v1168
    %v1189 = vpack.c.b16 %v1171, %v1169
    %v1190 = vpack.c.b16 %v1174, %v1172
    %v1191 = vpack.c.b16 %v1175, %v1173
    %1208 = vmatprep.subr.bf16.mxu0 %v1191
    %1209 = vmatpush1.bf16.msra.mxu0 %v1190
    %1210 = vmatprep.subr.bf16.mxu0 %v1189
    %1211 = vmatpush1.bf16.msra.mxu0 %v1188
    %1212 = vmatprep.subr.bf16.mxu0 %v1187
    %1213 = vmatpush1.bf16.msra.mxu0 %v1186
    %1214 = vmatprep.subr.bf16.mxu0 %v1185
    %1215 = vmatpush1.bf16.msra.mxu0 %v1184
    %1216 = vmatprep.subr.bf16.mxu0 %v1183
    %1217 = vmatpush1.bf16.msra.mxu0 %v1182
    %1218 = vmatprep.subr.bf16.mxu0 %v1181
    %1219 = vmatpush1.bf16.msra.mxu0 %v1180
    %1220 = vmatprep.subr.bf16.mxu0 %v1179
    %1221 = vmatpush1.bf16.msra.mxu0 %v1178
    %1222 = vmatprep.subr.bf16.mxu0 %v1177
    %1223 = vmatpush1.bf16.msra.mxu0 %v1176
    %1224 = vmatprep.subr.bf16.mxu0 0
    %1225 = vmatpush2.bf16.msra.mxu0 0
    %1226 = vmatprep.subr.bf16.mxu0 0
    %1227 = vmatpush2.bf16.msra.mxu0 0
    %1228 = vmatprep.subr.bf16.mxu0 0
    %1229 = vmatpush2.bf16.msra.mxu0 0
    %1230 = vmatprep.subr.bf16.mxu0 0
    %1231 = vmatpush2.bf16.msra.mxu0 0
    %1232 = vmatprep.subr.bf16.mxu0 0
    %1233 = vmatpush2.bf16.msra.mxu0 0
    %1234 = vmatprep.subr.bf16.mxu0 0
    %1235 = vmatpush2.bf16.msra.mxu0 0
    %1236 = vmatprep.subr.bf16.mxu0 0
    %1237 = vmatpush2.bf16.msra.mxu0 0
    %1238 = vmatprep.subr.bf16.mxu0 0
    %1239 = vmatpush2.bf16.msra.mxu0 0
    %1240 = vmatprep.mubr.bf16.mxu0 0
    %1241 = vmatmul.mubr.bf16.gmra.mxu0 %v1126
    %v1242 = vpop.f32.mrf.mxu0
    %v1243 = vadd.f32 0.0, %v1242
    %v1244 = vpop.f32.mrf.mxu0
    %v1245 = vadd.f32 0.0, %v1244
    %v1246 = vpop.f32.mrf.mxu0
    %v1247 = vpop.f32.mrf.mxu0
    %1248 = vdwg.mxu0
    %v1249 = vrot.slane %v1122, 7
    %v1250 = vsel %vm1124, %v1249, %v1121
    %v1251 = vpack.c.b16 %v1250, %v1250
    %v1269 = vunpack.c.l.b16 %v1087
    %v1270 = vunpack.c.h.b16 %v1087
    %v1271 = vunpack.c.l.b16 %v1088
    %v1272 = vunpack.c.h.b16 %v1088
    %v1273 = vunpack.c.l.b16 %v1089
    %v1274 = vunpack.c.h.b16 %v1089
    %v1275 = vunpack.c.l.b16 %v1090
    %v1276 = vunpack.c.h.b16 %v1090
    %v1277 = vunpack.c.l.b16 %v1091
    %v1278 = vunpack.c.h.b16 %v1091
    %v1279 = vunpack.c.l.b16 %v1092
    %v1280 = vunpack.c.h.b16 %v1092
    %v1281 = vunpack.c.l.b16 %v1093
    %v1282 = vunpack.c.h.b16 %v1093
    %v1283 = vunpack.c.l.b16 %v1094
    %v1284 = vunpack.c.h.b16 %v1094
    %v1285 = vunpack.c.l.b16 %v1095
    %v1286 = vunpack.c.h.b16 %v1095
    %v1287 = vunpack.c.l.b16 %v1096
    %v1288 = vunpack.c.h.b16 %v1096
    %v1289 = vunpack.c.l.b16 %v1097
    %v1290 = vunpack.c.h.b16 %v1097
    %v1291 = vunpack.c.l.b16 %v1098
    %v1292 = vunpack.c.h.b16 %v1098
    %v1293 = vunpack.c.l.b16 %v1099
    %v1294 = vunpack.c.h.b16 %v1099
    %v1295 = vunpack.c.l.b16 %v1100
    %v1296 = vunpack.c.h.b16 %v1100
    %v1297 = vunpack.c.l.b16 %v1101
    %v1298 = vunpack.c.h.b16 %v1101
    %v1299 = vunpack.c.l.b16 %v1102
    %v1300 = vunpack.c.h.b16 %v1102
    %v1301 = vpack.c.b16 %v1271, %v1269
    %v1302 = vpack.c.b16 %v1272, %v1270
    %v1303 = vpack.c.b16 %v1275, %v1273
    %v1304 = vpack.c.b16 %v1276, %v1274
    %v1305 = vpack.c.b16 %v1279, %v1277
    %v1306 = vpack.c.b16 %v1280, %v1278
    %v1307 = vpack.c.b16 %v1283, %v1281
    %v1308 = vpack.c.b16 %v1284, %v1282
    %v1309 = vpack.c.b16 %v1287, %v1285
    %v1310 = vpack.c.b16 %v1288, %v1286
    %v1311 = vpack.c.b16 %v1291, %v1289
    %v1312 = vpack.c.b16 %v1292, %v1290
    %v1313 = vpack.c.b16 %v1295, %v1293
    %v1314 = vpack.c.b16 %v1296, %v1294
    %v1315 = vpack.c.b16 %v1299, %v1297
    %v1316 = vpack.c.b16 %v1300, %v1298
    %1333 = vmatprep.subr.bf16.mxu0 %v1316
    %1334 = vmatpush1.bf16.msra.mxu0 %v1315
    %1335 = vmatprep.subr.bf16.mxu0 %v1314
    %1336 = vmatpush1.bf16.msra.mxu0 %v1313
    %1337 = vmatprep.subr.bf16.mxu0 %v1312
    %1338 = vmatpush1.bf16.msra.mxu0 %v1311
    %1339 = vmatprep.subr.bf16.mxu0 %v1310
    %1340 = vmatpush1.bf16.msra.mxu0 %v1309
    %1341 = vmatprep.subr.bf16.mxu0 %v1308
    %1342 = vmatpush1.bf16.msra.mxu0 %v1307
    %1343 = vmatprep.subr.bf16.mxu0 %v1306
    %1344 = vmatpush1.bf16.msra.mxu0 %v1305
    %1345 = vmatprep.subr.bf16.mxu0 %v1304
    %1346 = vmatpush1.bf16.msra.mxu0 %v1303
    %1347 = vmatprep.subr.bf16.mxu0 %v1302
    %1348 = vmatpush1.bf16.msra.mxu0 %v1301
    %1349 = vmatprep.subr.bf16.mxu0 0
    %1350 = vmatpush2.bf16.msra.mxu0 0
    %1351 = vmatprep.subr.bf16.mxu0 0
    %1352 = vmatpush2.bf16.msra.mxu0 0
    %1353 = vmatprep.subr.bf16.mxu0 0
    %1354 = vmatpush2.bf16.msra.mxu0 0
    %1355 = vmatprep.subr.bf16.mxu0 0
    %1356 = vmatpush2.bf16.msra.mxu0 0
    %1357 = vmatprep.subr.bf16.mxu0 0
    %1358 = vmatpush2.bf16.msra.mxu0 0
    %1359 = vmatprep.subr.bf16.mxu0 0
    %1360 = vmatpush2.bf16.msra.mxu0 0
    %1361 = vmatprep.subr.bf16.mxu0 0
    %1362 = vmatpush2.bf16.msra.mxu0 0
    %1363 = vmatprep.subr.bf16.mxu0 0
    %1364 = vmatpush2.bf16.msra.mxu0 0
    %1365 = vmatprep.mubr.bf16.mxu0 0
    %1366 = vmatmul.mubr.bf16.gmra.mxu0 %v1251
    %v1367 = vpop.f32.mrf.mxu0
    %v1368 = vadd.f32 %v1243, %v1367
    %v1369 = vpop.f32.mrf.mxu0
    %v1370 = vadd.f32 %v1245, %v1369
    %v1371 = vpop.f32.mrf.mxu0
    %v1372 = vpop.f32.mrf.mxu0
    %1373 = vdwg.mxu0
    %v1374 = vld [vmem:[#allocation5 + $0x2c0] sm:$0xff]
    %v1375 = vld [vmem:[#allocation5 + $0x2c8] sm:$0xff]
    %v1376 = vld [vmem:[#allocation5 + $0x2d0] sm:$0xff]
    %v1377 = vld [vmem:[#allocation5 + $0x2d8] sm:$0xff]
    %v1378 = vld [vmem:[#allocation5 + $0x2e0] sm:$0xff]
    %v1379 = vld [vmem:[#allocation5 + $0x2e8] sm:$0xff]
    %v1380 = vld [vmem:[#allocation5 + $0x2f0] sm:$0xff]
    %v1381 = vld [vmem:[#allocation5 + $0x2f8] sm:$0xff]
    %v1382 = vld [vmem:[#allocation5 + $0x300] sm:$0xff]
    %v1383 = vld [vmem:[#allocation5 + $0x308] sm:$0xff]
    %v1384 = vld [vmem:[#allocation5 + $0x310] sm:$0xff]
    %v1385 = vld [vmem:[#allocation5 + $0x318] sm:$0xff]
    %v1386 = vld [vmem:[#allocation5 + $0x320] sm:$0xff]
    %v1387 = vld [vmem:[#allocation5 + $0x328] sm:$0xff]
    %v1388 = vld [vmem:[#allocation5 + $0x330] sm:$0xff]
    %v1389 = vld [vmem:[#allocation5 + $0x338] sm:$0xff]
    %v1390 = vrot.slane %v1121, 2
    %v1391 = vrot.slane %v1122, 1
    %v1392 = vsel %vm1124, %v1391, %v1390
    %v1393 = vpack.c.b16 %v1392, %v1392
    %v1411 = vunpack.c.l.b16 %v1374
    %v1412 = vunpack.c.h.b16 %v1374
    %v1413 = vunpack.c.l.b16 %v1375
    %v1414 = vunpack.c.h.b16 %v1375
    %v1415 = vunpack.c.l.b16 %v1376
    %v1416 = vunpack.c.h.b16 %v1376
    %v1417 = vunpack.c.l.b16 %v1377
    %v1418 = vunpack.c.h.b16 %v1377
    %v1419 = vunpack.c.l.b16 %v1378
    %v1420 = vunpack.c.h.b16 %v1378
    %v1421 = vunpack.c.l.b16 %v1379
    %v1422 = vunpack.c.h.b16 %v1379
    %v1423 = vunpack.c.l.b16 %v1380
    %v1424 = vunpack.c.h.b16 %v1380
    %v1425 = vunpack.c.l.b16 %v1381
    %v1426 = vunpack.c.h.b16 %v1381
    %v1427 = vunpack.c.l.b16 %v1382
    %v1428 = vunpack.c.h.b16 %v1382
    %v1429 = vunpack.c.l.b16 %v1383
    %v1430 = vunpack.c.h.b16 %v1383
    %v1431 = vunpack.c.l.b16 %v1384
    %v1432 = vunpack.c.h.b16 %v1384
    %v1433 = vunpack.c.l.b16 %v1385
    %v1434 = vunpack.c.h.b16 %v1385
    %v1435 = vunpack.c.l.b16 %v1386
    %v1436 = vunpack.c.h.b16 %v1386
    %v1437 = vunpack.c.l.b16 %v1387
    %v1438 = vunpack.c.h.b16 %v1387
    %v1439 = vunpack.c.l.b16 %v1388
    %v1440 = vunpack.c.h.b16 %v1388
    %v1441 = vunpack.c.l.b16 %v1389
    %v1442 = vunpack.c.h.b16 %v1389
    %v1443 = vpack.c.b16 %v1413, %v1411
    %v1444 = vpack.c.b16 %v1414, %v1412
    %v1445 = vpack.c.b16 %v1417, %v1415
    %v1446 = vpack.c.b16 %v1418, %v1416
    %v1447 = vpack.c.b16 %v1421, %v1419
    %v1448 = vpack.c.b16 %v1422, %v1420
    %v1449 = vpack.c.b16 %v1425, %v1423
    %v1450 = vpack.c.b16 %v1426, %v1424
    %v1451 = vpack.c.b16 %v1429, %v1427
    %v1452 = vpack.c.b16 %v1430, %v1428
    %v1453 = vpack.c.b16 %v1433, %v1431
    %v1454 = vpack.c.b16 %v1434, %v1432
    %v1455 = vpack.c.b16 %v1437, %v1435
    %v1456 = vpack.c.b16 %v1438, %v1436
    %v1457 = vpack.c.b16 %v1441, %v1439
    %v1458 = vpack.c.b16 %v1442, %v1440
    %1475 = vmatprep.subr.bf16.mxu0 %v1458
    %1476 = vmatpush1.bf16.msra.mxu0 %v1457
    %1477 = vmatprep.subr.bf16.mxu0 %v1456
    %1478 = vmatpush1.bf16.msra.mxu0 %v1455
    %1479 = vmatprep.subr.bf16.mxu0 %v1454
    %1480 = vmatpush1.bf16.msra.mxu0 %v1453
    %1481 = vmatprep.subr.bf16.mxu0 %v1452
    %1482 = vmatpush1.bf16.msra.mxu0 %v1451
    %1483 = vmatprep.subr.bf16.mxu0 %v1450
    %1484 = vmatpush1.bf16.msra.mxu0 %v1449
    %1485 = vmatprep.subr.bf16.mxu0 %v1448
    %1486 = vmatpush1.bf16.msra.mxu0 %v1447
    %1487 = vmatprep.subr.bf16.mxu0 %v1446
    %1488 = vmatpush1.bf16.msra.mxu0 %v1445
    %1489 = vmatprep.subr.bf16.mxu0 %v1444
    %1490 = vmatpush1.bf16.msra.mxu0 %v1443
    %1491 = vmatprep.subr.bf16.mxu0 0
    %1492 = vmatpush2.bf16.msra.mxu0 0
    %1493 = vmatprep.subr.bf16.mxu0 0
    %1494 = vmatpush2.bf16.msra.mxu0 0
    %1495 = vmatprep.subr.bf16.mxu0 0
    %1496 = vmatpush2.bf16.msra.mxu0 0
    %1497 = vmatprep.subr.bf16.mxu0 0
    %1498 = vmatpush2.bf16.msra.mxu0 0
    %1499 = vmatprep.subr.bf16.mxu0 0
    %1500 = vmatpush2.bf16.msra.mxu0 0
    %1501 = vmatprep.subr.bf16.mxu0 0
    %1502 = vmatpush2.bf16.msra.mxu0 0
    %1503 = vmatprep.subr.bf16.mxu0 0
    %1504 = vmatpush2.bf16.msra.mxu0 0
    %1505 = vmatprep.subr.bf16.mxu0 0
    %1506 = vmatpush2.bf16.msra.mxu0 0
    %1507 = vmatprep.mubr.bf16.mxu0 0
    %1508 = vmatmul.mubr.bf16.gmra.mxu0 %v1393
    %v1509 = vpop.f32.mrf.mxu0
    %v1510 = vadd.f32 0.0, %v1509
    %v1511 = vpop.f32.mrf.mxu0
    %v1512 = vadd.f32 0.0, %v1511
    %v1513 = vpop.f32.mrf.mxu0
    %v1514 = vpop.f32.mrf.mxu0
    %1515 = vdwg.mxu0
    %v1516 = vadd.f32 %v1368, %v1510
    %v1517 = vadd.f32 %v1370, %v1512
    %v1518 = vld [vmem:[#allocation5 + $0x340] sm:$0xff]
    %v1519 = vld [vmem:[#allocation5 + $0x348] sm:$0xff]
    %v1520 = vld [vmem:[#allocation5 + $0x350] sm:$0xff]
    %v1521 = vld [vmem:[#allocation5 + $0x358] sm:$0xff]
    %v1522 = vld [vmem:[#allocation5 + $0x360] sm:$0xff]
    %v1523 = vld [vmem:[#allocation5 + $0x368] sm:$0xff]
    %v1524 = vld [vmem:[#allocation5 + $0x370] sm:$0xff]
    %v1525 = vld [vmem:[#allocation5 + $0x378] sm:$0xff]
    %v1526 = vld [vmem:[#allocation5 + $0x380] sm:$0xff]
    %v1527 = vld [vmem:[#allocation5 + $0x388] sm:$0xff]
    %v1528 = vld [vmem:[#allocation5 + $0x390] sm:$0xff]
    %v1529 = vld [vmem:[#allocation5 + $0x398] sm:$0xff]
    %v1530 = vld [vmem:[#allocation5 + $0x3a0] sm:$0xff]
    %v1531 = vld [vmem:[#allocation5 + $0x3a8] sm:$0xff]
    %v1532 = vld [vmem:[#allocation5 + $0x3b0] sm:$0xff]
    %v1533 = vld [vmem:[#allocation5 + $0x3b8] sm:$0xff]
    %v1534 = vrot.slane %v1121, 3
    %v1535 = vrot.slane %v1122, 2
    %v1536 = vsel %vm1124, %v1535, %v1534
    %v1537 = vpack.c.b16 %v1536, %v1536
    %v1555 = vunpack.c.l.b16 %v1518
    %v1556 = vunpack.c.h.b16 %v1518
    %v1557 = vunpack.c.l.b16 %v1519
    %v1558 = vunpack.c.h.b16 %v1519
    %v1559 = vunpack.c.l.b16 %v1520
    %v1560 = vunpack.c.h.b16 %v1520
    %v1561 = vunpack.c.l.b16 %v1521
    %v1562 = vunpack.c.h.b16 %v1521
    %v1563 = vunpack.c.l.b16 %v1522
    %v1564 = vunpack.c.h.b16 %v1522
    %v1565 = vunpack.c.l.b16 %v1523
    %v1566 = vunpack.c.h.b16 %v1523
    %v1567 = vunpack.c.l.b16 %v1524
    %v1568 = vunpack.c.h.b16 %v1524
    %v1569 = vunpack.c.l.b16 %v1525
    %v1570 = vunpack.c.h.b16 %v1525
    %v1571 = vunpack.c.l.b16 %v1526
    %v1572 = vunpack.c.h.b16 %v1526
    %v1573 = vunpack.c.l.b16 %v1527
    %v1574 = vunpack.c.h.b16 %v1527
    %v1575 = vunpack.c.l.b16 %v1528
    %v1576 = vunpack.c.h.b16 %v1528
    %v1577 = vunpack.c.l.b16 %v1529
    %v1578 = vunpack.c.h.b16 %v1529
    %v1579 = vunpack.c.l.b16 %v1530
    %v1580 = vunpack.c.h.b16 %v1530
    %v1581 = vunpack.c.l.b16 %v1531
    %v1582 = vunpack.c.h.b16 %v1531
    %v1583 = vunpack.c.l.b16 %v1532
    %v1584 = vunpack.c.h.b16 %v1532
    %v1585 = vunpack.c.l.b16 %v1533
    %v1586 = vunpack.c.h.b16 %v1533
    %v1587 = vpack.c.b16 %v1557, %v1555
    %v1588 = vpack.c.b16 %v1558, %v1556
    %v1589 = vpack.c.b16 %v1561, %v1559
    %v1590 = vpack.c.b16 %v1562, %v1560
    %v1591 = vpack.c.b16 %v1565, %v1563
    %v1592 = vpack.c.b16 %v1566, %v1564
    %v1593 = vpack.c.b16 %v1569, %v1567
    %v1594 = vpack.c.b16 %v1570, %v1568
    %v1595 = vpack.c.b16 %v1573, %v1571
    %v1596 = vpack.c.b16 %v1574, %v1572
    %v1597 = vpack.c.b16 %v1577, %v1575
    %v1598 = vpack.c.b16 %v1578, %v1576
    %v1599 = vpack.c.b16 %v1581, %v1579
    %v1600 = vpack.c.b16 %v1582, %v1580
    %v1601 = vpack.c.b16 %v1585, %v1583
    %v1602 = vpack.c.b16 %v1586, %v1584
    %1619 = vmatprep.subr.bf16.mxu0 %v1602
    %1620 = vmatpush1.bf16.msra.mxu0 %v1601
    %1621 = vmatprep.subr.bf16.mxu0 %v1600
    %1622 = vmatpush1.bf16.msra.mxu0 %v1599
    %1623 = vmatprep.subr.bf16.mxu0 %v1598
    %1624 = vmatpush1.bf16.msra.mxu0 %v1597
    %1625 = vmatprep.subr.bf16.mxu0 %v1596
    %1626 = vmatpush1.bf16.msra.mxu0 %v1595
    %1627 = vmatprep.subr.bf16.mxu0 %v1594
    %1628 = vmatpush1.bf16.msra.mxu0 %v1593
    %1629 = vmatprep.subr.bf16.mxu0 %v1592
    %1630 = vmatpush1.bf16.msra.mxu0 %v1591
    %1631 = vmatprep.subr.bf16.mxu0 %v1590
    %1632 = vmatpush1.bf16.msra.mxu0 %v1589
    %1633 = vmatprep.subr.bf16.mxu0 %v1588
    %1634 = vmatpush1.bf16.msra.mxu0 %v1587
    %1635 = vmatprep.subr.bf16.mxu0 0
    %1636 = vmatpush2.bf16.msra.mxu0 0
    %1637 = vmatprep.subr.bf16.mxu0 0
    %1638 = vmatpush2.bf16.msra.mxu0 0
    %1639 = vmatprep.subr.bf16.mxu0 0
    %1640 = vmatpush2.bf16.msra.mxu0 0
    %1641 = vmatprep.subr.bf16.mxu0 0
    %1642 = vmatpush2.bf16.msra.mxu0 0
    %1643 = vmatprep.subr.bf16.mxu0 0
    %1644 = vmatpush2.bf16.msra.mxu0 0
    %1645 = vmatprep.subr.bf16.mxu0 0
    %1646 = vmatpush2.bf16.msra.mxu0 0
    %1647 = vmatprep.subr.bf16.mxu0 0
    %1648 = vmatpush2.bf16.msra.mxu0 0
    %1649 = vmatprep.subr.bf16.mxu0 0
    %1650 = vmatpush2.bf16.msra.mxu0 0
    %1651 = vmatprep.mubr.bf16.mxu0 0
    %1652 = vmatmul.mubr.bf16.gmra.mxu0 %v1537
    %v1653 = vpop.f32.mrf.mxu0
    %v1654 = vadd.f32 0.0, %v1653
    %v1655 = vpop.f32.mrf.mxu0
    %v1656 = vadd.f32 0.0, %v1655
    %v1657 = vpop.f32.mrf.mxu0
    %v1658 = vpop.f32.mrf.mxu0
    %1659 = vdwg.mxu0
    %v1660 = vadd.f32 %v1516, %v1654
    %v1661 = vadd.f32 %v1517, %v1656
    %v1662 = vld [vmem:[#allocation5 + $0x3c0] sm:$0x11]
    %v1663 = vunpack.c.l.bf16 %v1662
    %v1664 = vunpack.c.h.bf16 %v1662
    %v1665 = vlaneseq
    %v1666 = vshrl.u32 %v1665, 7
    %v1667 = vsub.s32 0, %v1666
    %v1668 = vrot.slane %v1663, %v1667
    %v1669 = vlaneseq
    %v1670 = vshrl.u32 %v1669, 7
    %v1671 = vsub.s32 0, %v1670
    %v1672 = vrot.slane %v1664, %v1671
    %v1673 = vadd.f32 %v1660, %v1668
    %v1674 = vadd.f32 %v1661, %v1672
    %v1675 = vxor.u32 %v1674, 2147483648
    %v1676 = vmul.f32 %v1675, 1.442695
    %v1677 = vpow.pop %v1676
    %v1678 = vadd.f32 %v1677, 1.0
    %v1679 = vrcp.pop %v1678
    %v1680 = vmul.f32 1.0, %v1679
    %v1681 = vmul.f32 %v1673, %v1680
    %vm1682 = vcmask 1041408
    %v1683 = vsel %vm1682, %v1681, 0.0
    %1684 = vadd.xlane.f32.xlu0 %v1683
    %v1685 = vpop.xlane.xlu0 %1684
    %v1686 = vmul.f32 %v1685, %v1058
    %v1687 = vsub.f32 %v1681, %v1686
    %v1688 = vmul.f32 %v1687, %v1687
    %v1689 = vsel %vm1682, %v1688, 0.0
    %1690 = vadd.xlane.f32.xlu0 %v1689
    %v1691 = vpop.xlane.xlu0 %1690
    %v1692 = vmul.f32 %v1691, %v1058
    %v1693 = vld [vmem:[#allocation5 + $0x3d0] sm:$0x1]
    %v1694 = vunpack.c.l.bf16 %v1693
    %v1695 = vld [vmem:[#allocation5 + $0x3e0] sm:$0x1]
    %v1696 = vunpack.c.l.bf16 %v1695
    %v1697 = vadd.f32 %v1692, 1e-05
    %v1698 = vrsqrt.pop %v1697
    %v1699 = vmul.f32 %v1687, %v1698
    %v1700 = vlaneseq
    %v1701 = vshrl.u32 %v1700, 7
    %v1702 = vsub.s32 0, %v1701
    %v1703 = vrot.slane %v1694, %v1702
    %v1704 = vmul.f32 %v1699, %v1703
    %v1705 = vlaneseq
    %v1706 = vshrl.u32 %v1705, 7
    %v1707 = vsub.s32 0, %v1706
    %v1708 = vrot.slane %v1696, %v1707
    %v1709 = vadd.f32 %v1704, %v1708
    %v1710 = vpack.c.bf16 %v1709, %v1709
    %v1711 = vld [vmem:[#allocation5 + $0x3f0] sm:$0xf]
    %v1712 = vld [vmem:[#allocation5 + $0x3f8] sm:$0xf]
    %v1713 = vld [vmem:[#allocation5 + $0x400] sm:$0xf]
    %v1714 = vld [vmem:[#allocation5 + $0x408] sm:$0xf]
    %v1715 = vld [vmem:[#allocation5 + $0x410] sm:$0xf]
    %v1716 = vld [vmem:[#allocation5 + $0x418] sm:$0xf]
    %v1717 = vld [vmem:[#allocation5 + $0x420] sm:$0xf]
    %v1718 = vld [vmem:[#allocation5 + $0x428] sm:$0xf]
    %v1719 = vld [vmem:[#allocation5 + $0x430] sm:$0xf]
    %v1720 = vld [vmem:[#allocation5 + $0x438] sm:$0xf]
    %v1721 = vld [vmem:[#allocation5 + $0x440] sm:$0xf]
    %v1722 = vld [vmem:[#allocation5 + $0x448] sm:$0xf]
    %v1723 = vld [vmem:[#allocation5 + $0x450] sm:$0xf]
    %v1724 = vld [vmem:[#allocation5 + $0x458] sm:$0xf]
    %v1725 = vld [vmem:[#allocation5 + $0x460] sm:$0xf]
    %v1726 = vld [vmem:[#allocation5 + $0x468] sm:$0xf]
    %v1727 = vld [vmem:[#allocation5 + $0x470] sm:$0x1]
    %v1728 = vunpack.c.l.bf16 %v1727
    %v1729 = vlaneseq
    %v1730 = vshrl.u32 %v1729, 7
    %v1731 = vsub.s32 0, %v1730
    %v1732 = vrot.slane %v1728, %v1731
    %v1749 = vunpack.c.l.b16 %v1711
    %v1750 = vunpack.c.l.b16 %v1712
    %v1751 = vunpack.c.l.b16 %v1713
    %v1752 = vunpack.c.l.b16 %v1714
    %v1753 = vunpack.c.l.b16 %v1715
    %v1754 = vunpack.c.l.b16 %v1716
    %v1755 = vunpack.c.l.b16 %v1717
    %v1756 = vunpack.c.l.b16 %v1718
    %v1757 = vunpack.c.l.b16 %v1719
    %v1758 = vunpack.c.l.b16 %v1720
    %v1759 = vunpack.c.l.b16 %v1721
    %v1760 = vunpack.c.l.b16 %v1722
    %v1761 = vunpack.c.l.b16 %v1723
    %v1762 = vunpack.c.l.b16 %v1724
    %v1763 = vunpack.c.l.b16 %v1725
    %v1764 = vunpack.c.l.b16 %v1726
    %v1765 = vpack.c.b16 %v1750, %v1749
    %v1766 = vpack.c.b16 %v1752, %v1751
    %v1767 = vpack.c.b16 %v1754, %v1753
    %v1768 = vpack.c.b16 %v1756, %v1755
    %v1769 = vpack.c.b16 %v1758, %v1757
    %v1770 = vpack.c.b16 %v1760, %v1759
    %v1771 = vpack.c.b16 %v1762, %v1761
    %v1772 = vpack.c.b16 %v1764, %v1763
    %1781 = vmatprep.subr.bf16.mxu0 0
    %1782 = vmatpush1.bf16.msra.mxu0 %v1772
    %1783 = vmatprep.subr.bf16.mxu0 0
    %1784 = vmatpush1.bf16.msra.mxu0 %v1771
    %1785 = vmatprep.subr.bf16.mxu0 0
    %1786 = vmatpush1.bf16.msra.mxu0 %v1770
    %1787 = vmatprep.subr.bf16.mxu0 0
    %1788 = vmatpush1.bf16.msra.mxu0 %v1769
    %1789 = vmatprep.subr.bf16.mxu0 0
    %1790 = vmatpush1.bf16.msra.mxu0 %v1768
    %1791 = vmatprep.subr.bf16.mxu0 0
    %1792 = vmatpush1.bf16.msra.mxu0 %v1767
    %1793 = vmatprep.subr.bf16.mxu0 0
    %1794 = vmatpush1.bf16.msra.mxu0 %v1766
    %1795 = vmatprep.subr.bf16.mxu0 0
    %1796 = vmatpush1.bf16.msra.mxu0 %v1765
    %1797 = vmatprep.subr.bf16.mxu0 0
    %1798 = vmatpush2.bf16.msra.mxu0 0
    %1799 = vmatprep.subr.bf16.mxu0 0
    %1800 = vmatpush2.bf16.msra.mxu0 0
    %1801 = vmatprep.subr.bf16.mxu0 0
    %1802 = vmatpush2.bf16.msra.mxu0 0
    %1803 = vmatprep.subr.bf16.mxu0 0
    %1804 = vmatpush2.bf16.msra.mxu0 0
    %1805 = vmatprep.subr.bf16.mxu0 0
    %1806 = vmatpush2.bf16.msra.mxu0 0
    %1807 = vmatprep.subr.bf16.mxu0 0
    %1808 = vmatpush2.bf16.msra.mxu0 0
    %1809 = vmatprep.subr.bf16.mxu0 0
    %1810 = vmatpush2.bf16.msra.mxu0 0
    %1811 = vmatprep.subr.bf16.mxu0 0
    %1812 = vmatpush2.bf16.msra.mxu0 0
    %1813 = vmatprep.mubr.bf16.mxu0 0
    %1814 = vmatmul.mubr.bf16.gmra.mxu0 %v1710
    %v1815 = vpop.f32.mrf.mxu0
    %v1816 = vadd.f32 %v1732, %v1815
    %v1817 = vpop.f32.mrf.mxu0
    %v1818 = vpop.f32.mrf.mxu0
    %v1819 = vpop.f32.mrf.mxu0
    %1820 = vdwg.mxu0
    %v1821 = vxor.u32 %v1816, 2147483648
    %v1822 = vmul.f32 %v1821, 1.442695
    %v1823 = vpow.pop %v1822
    %v1824 = vadd.f32 %v1823, 1.0
    %v1825 = vrcp.pop %v1824
    %v1826 = vmul.f32 1.0, %v1825
    %v1827 = vpack.c.bf16 %v1826, %v1826
    %v1828 = vld [vmem:[#allocation5 + $0x480] sm:$0xf]
    %v1829 = vld [vmem:[#allocation5 + $0x488] sm:$0xf]
    %v1830 = vld [vmem:[#allocation5 + $0x490] sm:$0xf]
    %v1831 = vld [vmem:[#allocation5 + $0x498] sm:$0xf]
    %v1832 = vld [vmem:[#allocation5 + $0x4a0] sm:$0xf]
    %v1833 = vld [vmem:[#allocation5 + $0x4a8] sm:$0xf]
    %v1834 = vld [vmem:[#allocation5 + $0x4b0] sm:$0xf]
    %v1835 = vld [vmem:[#allocation5 + $0x4b8] sm:$0xf]
    %v1836 = vld [vmem:[#allocation5 + $0x4c0] sm:$0xf]
    %v1837 = vld [vmem:[#allocation5 + $0x4c8] sm:$0xf]
    %v1838 = vld [vmem:[#allocation5 + $0x4d0] sm:$0xf]
    %v1839 = vld [vmem:[#allocation5 + $0x4d8] sm:$0xf]
    %v1840 = vld [vmem:[#allocation5 + $0x4e0] sm:$0xf]
    %v1841 = vld [vmem:[#allocation5 + $0x4e8] sm:$0xf]
    %v1842 = vld [vmem:[#allocation5 + $0x4f0] sm:$0xf]
    %v1843 = vld [vmem:[#allocation5 + $0x4f8] sm:$0xf]
    %v1844 = vld [vmem:[#allocation5 + $0x500] sm:$0x1]
    %v1845 = vunpack.c.l.bf16 %v1844
    %v1846 = vlaneseq
    %v1847 = vshrl.u32 %v1846, 7
    %v1848 = vsub.s32 0, %v1847
    %v1849 = vrot.slane %v1845, %v1848
    %v1866 = vunpack.c.l.b16 %v1828
    %v1867 = vunpack.c.l.b16 %v1829
    %v1868 = vunpack.c.l.b16 %v1830
    %v1869 = vunpack.c.l.b16 %v1831
    %v1870 = vunpack.c.l.b16 %v1832
    %v1871 = vunpack.c.l.b16 %v1833
    %v1872 = vunpack.c.l.b16 %v1834
    %v1873 = vunpack.c.l.b16 %v1835
    %v1874 = vunpack.c.l.b16 %v1836
    %v1875 = vunpack.c.l.b16 %v1837
    %v1876 = vunpack.c.l.b16 %v1838
    %v1877 = vunpack.c.l.b16 %v1839
    %v1878 = vunpack.c.l.b16 %v1840
    %v1879 = vunpack.c.l.b16 %v1841
    %v1880 = vunpack.c.l.b16 %v1842
    %v1881 = vunpack.c.l.b16 %v1843
    %v1882 = vpack.c.b16 %v1867, %v1866
    %v1883 = vpack.c.b16 %v1869, %v1868
    %v1884 = vpack.c.b16 %v1871, %v1870
    %v1885 = vpack.c.b16 %v1873, %v1872
    %v1886 = vpack.c.b16 %v1875, %v1874
    %v1887 = vpack.c.b16 %v1877, %v1876
    %v1888 = vpack.c.b16 %v1879, %v1878
    %v1889 = vpack.c.b16 %v1881, %v1880
    %1898 = vmatprep.subr.bf16.mxu0 0
    %1899 = vmatpush1.bf16.msra.mxu0 %v1889
    %1900 = vmatprep.subr.bf16.mxu0 0
    %1901 = vmatpush1.bf16.msra.mxu0 %v1888
    %1902 = vmatprep.subr.bf16.mxu0 0
    %1903 = vmatpush1.bf16.msra.mxu0 %v1887
    %1904 = vmatprep.subr.bf16.mxu0 0
    %1905 = vmatpush1.bf16.msra.mxu0 %v1886
    %1906 = vmatprep.subr.bf16.mxu0 0
    %1907 = vmatpush1.bf16.msra.mxu0 %v1885
    %1908 = vmatprep.subr.bf16.mxu0 0
    %1909 = vmatpush1.bf16.msra.mxu0 %v1884
    %1910 = vmatprep.subr.bf16.mxu0 0
    %1911 = vmatpush1.bf16.msra.mxu0 %v1883
    %1912 = vmatprep.subr.bf16.mxu0 0
    %1913 = vmatpush1.bf16.msra.mxu0 %v1882
    %1914 = vmatprep.subr.bf16.mxu0 0
    %1915 = vmatpush2.bf16.msra.mxu0 0
    %1916 = vmatprep.subr.bf16.mxu0 0
    %1917 = vmatpush2.bf16.msra.mxu0 0
    %1918 = vmatprep.subr.bf16.mxu0 0
    %1919 = vmatpush2.bf16.msra.mxu0 0
    %1920 = vmatprep.subr.bf16.mxu0 0
    %1921 = vmatpush2.bf16.msra.mxu0 0
    %1922 = vmatprep.subr.bf16.mxu0 0
    %1923 = vmatpush2.bf16.msra.mxu0 0
    %1924 = vmatprep.subr.bf16.mxu0 0
    %1925 = vmatpush2.bf16.msra.mxu0 0
    %1926 = vmatprep.subr.bf16.mxu0 0
    %1927 = vmatpush2.bf16.msra.mxu0 0
    %1928 = vmatprep.subr.bf16.mxu0 0
    %1929 = vmatpush2.bf16.msra.mxu0 0
    %1930 = vmatprep.mubr.bf16.mxu0 0
    %1931 = vmatmul.mubr.bf16.gmra.mxu0 %v1827
    %v1932 = vpop.f32.mrf.mxu0
    %v1933 = vadd.f32 %v1849, %v1932
    %v1934 = vpop.f32.mrf.mxu0
    %v1935 = vpop.f32.mrf.mxu0
    %v1936 = vpop.f32.mrf.mxu0
    %1937 = vdwg.mxu0
    %1938 = vst [vmem:[#allocation7] sm:$0x3] %v1933
    // Predicated region
    $region18: #{fwd.1} parent=1 // pred_check
      _
    $region19: #{fwd.1} parent=1 // pred_check_branch
      %1940 = sbr.rel (0) target = $region21
    $region20: #{fwd.1} parent=1 // pred_region
      %s1942 = ssub.s32 32, 32
      %1943 = vsyncadd [#allocation4], %s1942
      %s1945 = sshll.u32 [#allocation7], 4
      %s1946 = int_to_ptr.vmem [resolvable:$true] %s1945
      %1948 = dma.vmem_to_hbm [thread:$0]  %s1946, 32, %s2, [#allocation4]
    $region21: #{fwd.1} parent=1 // pred_fallthru
      _
    // Predicated region
    $region22: #{fwd.1} parent=1 // pred_check
      _
    $region23: #{fwd.1} parent=1 // pred_check_branch
      %1950 = sbr.rel (0) target = $region25
    $region24: #{fwd.1} parent=1 // pred_region
      %1951 = dma.done [#allocation4], 32
    $region25: #{fwd.1} parent=1 // pred_fallthru
      _
    %1952 = vsyncpa [#allocation3], 1
    %1953 = vsyncpa [#allocation6], 1
    %1954 = vsyncpa [#allocation4], 1

</llo_original>
